<compile_context>
chip_gen: v6e
topology: v6e:2x2x1
jax: 0.10.0
libtpu: 0.0.40
codegen_flags: <defaults>
</compile_context>

<pallas_src>
import functools

import jax
import jax.numpy as jnp
import numpy as np
from jax.experimental import pallas as pl
from jax.experimental.pallas import tpu as pltpu


_FREQ_GROUP = 8  # frequencies vectorized per inner slab (one 8-sublane group)


def _aligned_groups(row_offset, count, group=_FREQ_GROUP):
    """Static (start, size) frequency groups (size <= group) chosen so that the output
    row where every group except possibly the first starts is a multiple of `group`
    (8 sublanes) -> unmasked vector stores for most slabs."""
    groups = []
    g = 0
    while g < count:
        rem = (row_offset + g) % group
        size = min(count - g, (group - rem) if rem else group)
        groups.append((g, size))
        g += size
    return tuple(groups)


def _choose_lane_tile(D, N, n_blocks, *, max_lane_tile, min_grid_steps,
                      vmem_budget_bytes):
    """Pick lane-tile width TD (multiple of 128) from a VMEM budget, then shrink it
    until the grid has enough steps for DMA/compute overlap and both v7x cores."""
    if D <= 128:
        return D                          # full-extent block (last dim == array dim)
    nb_pad = ((n_blocks + 7) // 8) * 8
    # Per-lane f32 bytes per grid step: double-buffered output + input blocks plus
    # ~4 (1, 8, TD) elementwise temporaries (xb / t / sin / cos) inside the body.
    bytes_per_lane = 4 * (2 * nb_pad + 2) + 4 * 4 * _FREQ_GROUP
    cap = (D // 128) * 128                # keep TD <= D; partial last tile is masked
    td = min(max_lane_tile, vmem_budget_bytes // bytes_per_lane, cap)
    td = max(128, (td // 128) * 128)
    want_lane_tiles = max(1, -(-min_grid_steps // max(N, 1)))
    while td > 128 and -(-D // td) < want_lane_tiles:
        td -= 128
    return td


def _sin_cos_kernel(freqs_ref, x_ref, o_ref, *, num_freqs, include_in,
                    sin_groups, cos_groups):
    """One grid step = one (batch row, lane tile) of the flattened C*H*W dim.

    freqs_ref : (F, 1)             sublane-major so each freq broadcasts along lanes
    x_ref     : (1, 1, TD)         input tile (one batch row)
    o_ref     : (1, n_blocks, TD)  output tile; rows = [x, sin(x f_i)..., cos(x f_i)...]
    """
    x = x_ref[0]                                   # (1, TD)
    td = x.shape[-1]
    base = 1 if include_in else 0
    odt = o_ref.dtype

    if include_in:
        o_ref[:, 0, :] = x.astype(odt)             # identity block (row 0)

    f = freqs_ref[...]                             # (F, 1)
    # Hoisted sublane broadcast of x: done once, reused by every frequency group
    # (JAX does not CSE broadcast_in_dim).
    xb = jnp.broadcast_to(x[:, None, :], (1, _FREQ_GROUP, td))

    # sin and cos use independently chosen static group boundaries so that all but the
    # first slab of each family starts on an 8-sublane-aligned output row -> unmasked
    # stores; the extra per-group multiply is negligible vs. the sin/cos evaluation.
    for g, gs in sin_groups:                       # static, unrolled at trace time
        t = xb[:, :gs, :] * f[g:g + gs, :][None, :, :]
        o_ref[:, base + g:base + g + gs, :] = jnp.sin(t).astype(odt)

    for g, gs in cos_groups:
        t = xb[:, :gs, :] * f[g:g + gs, :][None, :, :]
        o_ref[:, base + num_freqs + g:base + num_freqs + g + gs, :] = (
            jnp.cos(t).astype(odt))


def sin_cos_embed(x, freqs, *, include_in=True, out_dtype=None,
                  max_lane_tile=2048, min_grid_steps=8,
                  vmem_budget_bytes=8 * 1024 * 1024):
    """x: (N, C, H, W); freqs: (F,).

    Returns (N, C*(include_in + 2*F), H, W), matching the PyTorch module (ch_dim=1).
    `out_dtype` defaults to x.dtype; pass jnp.bfloat16 to halve the output stream if
    the consumer allows it (output bytes are ~(1+2F)x the input bytes).
    """
    N, C, H, W = x.shape
    F = int(freqs.shape[0])
    n_blocks = (1 if include_in else 0) + 2 * F
    D = C * H * W
    out_dtype = x.dtype if out_dtype is None else out_dtype

    # Free row-major reshapes: NCHW -> (N, 1, C*H*W) (extra unit dim keeps the
    # second-to-last block dim equal to the full array dim); the (N, n_blocks, D)
    # output has the same memory layout as (N, n_blocks*C, H, W).
    x3 = x.reshape(N, 1, D)
    freqs2d = freqs.reshape(F, 1).astype(x.dtype)

    TD = _choose_lane_tile(D, N, n_blocks, max_lane_tile=max_lane_tile,
                           min_grid_steps=min_grid_steps,
                           vmem_budget_bytes=vmem_budget_bytes)
    num_lane_tiles = pl.cdiv(D, TD)

    base = 1 if include_in else 0
    sin_groups = _aligned_groups(base, F)
    cos_groups = _aligned_groups(base + F, F)

    kernel = functools.partial(_sin_cos_kernel, num_freqs=F, include_in=include_in,
                               sin_groups=sin_groups, cos_groups=cos_groups)

    out_bytes = N * n_blocks * D * jnp.dtype(out_dtype).itemsize
    in_bytes = (N * D + F) * jnp.dtype(x.dtype).itemsize

    out_flat = pl.pallas_call(
        kernel,
        out_shape=jax.ShapeDtypeStruct((N, n_blocks, D), out_dtype),
        grid_spec=pltpu.PrefetchScalarGridSpec(
            num_scalar_prefetch=0,
            grid=(N, num_lane_tiles),
            in_specs=[
                pl.BlockSpec((F, 1), lambda n, d: (0, 0)),        # freqs (tiny, resident)
                pl.BlockSpec((1, 1, TD), lambda n, d: (n, 0, d)),  # x lane tile
            ],
            out_specs=pl.BlockSpec((1, n_blocks, TD), lambda n, d: (n, 0, d)),
        ),
        compiler_params=pltpu.CompilerParams(
            # Disjoint output blocks, read-only inputs: every grid step is independent,
            # so both axes can be sharded across v7x's 2 TensorCores.
            dimension_semantics=("parallel", "parallel"),
            vmem_limit_bytes=32 * 1024 * 1024,
        ),
        cost_estimate=pl.CostEstimate(
            flops=2 * N * D * F,               # x*f multiplies (sin + cos groups)
            transcendentals=2 * N * D * F,     # sin + cos
            bytes_accessed=in_bytes + out_bytes,
        ),
    )(freqs2d, x3)

    return out_flat.reshape(N, n_blocks * C, H, W)


def make_freqs(num_freqs=20, max_freq=10):
    # Deterministic parameter init, identical to the module's __init__:
    # 2.0 ** linspace(0, max_freq, num_freqs), float32.
    return jnp.asarray(
        2.0 ** np.linspace(start=0.0, stop=float(max_freq),
                           num=num_freqs).astype(np.float32),
        dtype=jnp.float32,
    )


def reference(x, freqs, include_in=True):
    out = [x] if include_in else []
    for f in freqs:
        out.append(jnp.sin(x * f))
    for f in freqs:
        out.append(jnp.cos(x * f))
    return jnp.concatenate(out, axis=1)


if __name__ == "__main__":
    num_freqs, max_freq = 20, 10
    freqs = make_freqs(num_freqs, max_freq)

    key = jax.random.PRNGKey(0)
    x = jax.random.normal(key, (2, 4, 16, 16), dtype=jnp.float32)

    out = sin_cos_embed(x, freqs, include_in=True)
    out = jax.block_until_ready(out)

    expected = reference(x, freqs, include_in=True)
    assert out.shape == (2, 4 * (1 + 2 * num_freqs), 16, 16), out.shape
    assert jnp.allclose(out, expected, atol=1e-5, rtol=1e-5), "mismatch vs reference"

    print("KERNEL_OK")
</pallas_src>

<mosaic_0001>
module attributes {stable_mosaic.version = 11 : i64} {
  func.func @_sin_cos_kernel(%arg0: i32, %arg1: i32, %arg2: memref<20x1xf32, #tpu.memory_space<vmem>>, %arg3: memref<1x1x256xf32, #tpu.memory_space<vmem>>, %arg4: memref<1x41x256xf32, #tpu.memory_space<vmem>>) attributes {dimension_semantics = [#tpu.dimension_semantics<parallel>, #tpu.dimension_semantics<parallel>], iteration_bounds = array<i64: 2, 4>, scalar_prefetch = 0 : i64, scratch_operands = 0 : i64, tpu.core_type = #tpu.core_type<tc>, window_params = [{pipeline_mode = #tpu.pipeline_mode<synchronous>, transform_indices = @transform_0, window_bounds = array<i64: 20, 1>}, {transform_indices = @transform_1, window_bounds = array<i64: 1, 1, 256>}, {transform_indices = @transform_2, window_bounds = array<i64: 1, 41, 256>}]} {
    %c0 = arith.constant 0 : index
    %c0_0 = arith.constant 0 : index
    %c0_1 = arith.constant 0 : index
    %0 = vector.load %arg3[%c0, %c0_0, %c0_1] : memref<1x1x256xf32, #tpu.memory_space<vmem>>, vector<1x1x256xf32>
    %1 = vector.shape_cast %0 : vector<1x1x256xf32> to vector<1x256xf32>
    %c0_2 = arith.constant 0 : index
    %c0_3 = arith.constant 0 : index
    %c0_4 = arith.constant 0 : index
    %2 = vector.load %arg4[%c0_2, %c0_3, %c0_4] : memref<1x41x256xf32, #tpu.memory_space<vmem>>, vector<1x1x256xf32>
    %3 = vector.shape_cast %2 : vector<1x1x256xf32> to vector<1x256xf32>
    %4 = vector.shape_cast %1 : vector<1x256xf32> to vector<1x1x256xf32>
    tpu.vector_store %arg4[%c0_2, %c0_3, %c0_4], %4 {strides = array<i32>} : memref<1x41x256xf32, #tpu.memory_space<vmem>>, vector<1x1x256xf32>,
    %c0_5 = arith.constant 0 : index
    %c0_6 = arith.constant 0 : index
    %5 = vector.load %arg2[%c0_5, %c0_6] : memref<20x1xf32, #tpu.memory_space<vmem>>, vector<20x1xf32>
    %6 = vector.shape_cast %1 : vector<1x256xf32> to vector<1x1x256xf32>
    %7 = vector.shape_cast %6 : vector<1x1x256xf32> to vector<1x1x256xf32>
    %8 = vector.broadcast %7 : vector<1x1x256xf32> to vector<1x8x256xf32>
    %9 = vector.extract_strided_slice %8 {offsets = [0, 0, 0], sizes = [1, 7, 256], strides = [1, 1, 1]} : vector<1x8x256xf32> to vector<1x7x256xf32>
    %10 = vector.extract_strided_slice %5 {offsets = [0, 0], sizes = [7, 1], strides = [1, 1]} : vector<20x1xf32> to vector<7x1xf32>
    %11 = vector.shape_cast %10 : vector<7x1xf32> to vector<1x7x1xf32>
    %12 = vector.broadcast %11 : vector<1x7x1xf32> to vector<1x7x256xf32>
    %13 = arith.mulf %9, %12 : vector<1x7x256xf32>
    %14 = math.sin %13 : vector<1x7x256xf32>
    %c0_7 = arith.constant 0 : index
    %c1 = arith.constant 1 : index
    %c0_8 = arith.constant 0 : index
    %15 = vector.load %arg4[%c0_7, %c1, %c0_8] : memref<1x41x256xf32, #tpu.memory_space<vmem>>, vector<1x7x256xf32>
    tpu.vector_store %arg4[%c0_7, %c1, %c0_8], %14 {strides = array<i32>} : memref<1x41x256xf32, #tpu.memory_space<vmem>>, vector<1x7x256xf32>,
    %16 = vector.extract_strided_slice %5 {offsets = [7, 0], sizes = [8, 1], strides = [1, 1]} : vector<20x1xf32> to vector<8x1xf32>
    %17 = vector.shape_cast %16 : vector<8x1xf32> to vector<1x8x1xf32>
    %18 = vector.broadcast %17 : vector<1x8x1xf32> to vector<1x8x256xf32>
    %19 = arith.mulf %8, %18 : vector<1x8x256xf32>
    %20 = math.sin %19 : vector<1x8x256xf32>
    %c0_9 = arith.constant 0 : index
    %c8 = arith.constant 8 : index
    %c0_10 = arith.constant 0 : index
    %21 = vector.load %arg4[%c0_9, %c8, %c0_10] : memref<1x41x256xf32, #tpu.memory_space<vmem>>, vector<1x8x256xf32>
    tpu.vector_store %arg4[%c0_9, %c8, %c0_10], %20 {strides = array<i32>} : memref<1x41x256xf32, #tpu.memory_space<vmem>>, vector<1x8x256xf32>,
    %22 = vector.extract_strided_slice %8 {offsets = [0, 0, 0], sizes = [1, 5, 256], strides = [1, 1, 1]} : vector<1x8x256xf32> to vector<1x5x256xf32>
    %23 = vector.extract_strided_slice %5 {offsets = [15, 0], sizes = [5, 1], strides = [1, 1]} : vector<20x1xf32> to vector<5x1xf32>
    %24 = vector.shape_cast %23 : vector<5x1xf32> to vector<1x5x1xf32>
    %25 = vector.broadcast %24 : vector<1x5x1xf32> to vector<1x5x256xf32>
    %26 = arith.mulf %22, %25 : vector<1x5x256xf32>
    %27 = math.sin %26 : vector<1x5x256xf32>
    %c0_11 = arith.constant 0 : index
    %c16 = arith.constant 16 : index
    %c0_12 = arith.constant 0 : index
    %28 = vector.load %arg4[%c0_11, %c16, %c0_12] : memref<1x41x256xf32, #tpu.memory_space<vmem>>, vector<1x5x256xf32>
    tpu.vector_store %arg4[%c0_11, %c16, %c0_12], %27 {strides = array<i32>} : memref<1x41x256xf32, #tpu.memory_space<vmem>>, vector<1x5x256xf32>,
    %29 = vector.extract_strided_slice %8 {offsets = [0, 0, 0], sizes = [1, 3, 256], strides = [1, 1, 1]} : vector<1x8x256xf32> to vector<1x3x256xf32>
    %30 = vector.extract_strided_slice %5 {offsets = [0, 0], sizes = [3, 1], strides = [1, 1]} : vector<20x1xf32> to vector<3x1xf32>
    %31 = vector.shape_cast %30 : vector<3x1xf32> to vector<1x3x1xf32>
    %32 = vector.broadcast %31 : vector<1x3x1xf32> to vector<1x3x256xf32>
    %33 = arith.mulf %29, %32 : vector<1x3x256xf32>
    %34 = math.cos %33 : vector<1x3x256xf32>
    %c0_13 = arith.constant 0 : index
    %c21 = arith.constant 21 : index
    %c0_14 = arith.constant 0 : index
    %35 = vector.load %arg4[%c0_13, %c21, %c0_14] : memref<1x41x256xf32, #tpu.memory_space<vmem>>, vector<1x3x256xf32>
    tpu.vector_store %arg4[%c0_13, %c21, %c0_14], %34 {strides = array<i32>} : memref<1x41x256xf32, #tpu.memory_space<vmem>>, vector<1x3x256xf32>,
    %36 = vector.extract_strided_slice %5 {offsets = [3, 0], sizes = [8, 1], strides = [1, 1]} : vector<20x1xf32> to vector<8x1xf32>
    %37 = vector.shape_cast %36 : vector<8x1xf32> to vector<1x8x1xf32>
    %38 = vector.broadcast %37 : vector<1x8x1xf32> to vector<1x8x256xf32>
    %39 = arith.mulf %8, %38 : vector<1x8x256xf32>
    %40 = math.cos %39 : vector<1x8x256xf32>
    %c0_15 = arith.constant 0 : index
    %c24 = arith.constant 24 : index
    %c0_16 = arith.constant 0 : index
    %41 = vector.load %arg4[%c0_15, %c24, %c0_16] : memref<1x41x256xf32, #tpu.memory_space<vmem>>, vector<1x8x256xf32>
    tpu.vector_store %arg4[%c0_15, %c24, %c0_16], %40 {strides = array<i32>} : memref<1x41x256xf32, #tpu.memory_space<vmem>>, vector<1x8x256xf32>,
    %42 = vector.extract_strided_slice %5 {offsets = [11, 0], sizes = [8, 1], strides = [1, 1]} : vector<20x1xf32> to vector<8x1xf32>
    %43 = vector.shape_cast %42 : vector<8x1xf32> to vector<1x8x1xf32>
    %44 = vector.broadcast %43 : vector<1x8x1xf32> to vector<1x8x256xf32>
    %45 = arith.mulf %8, %44 : vector<1x8x256xf32>
    %46 = math.cos %45 : vector<1x8x256xf32>
    %c0_17 = arith.constant 0 : index
    %c32 = arith.constant 32 : index
    %c0_18 = arith.constant 0 : index
    %47 = vector.load %arg4[%c0_17, %c32, %c0_18] : memref<1x41x256xf32, #tpu.memory_space<vmem>>, vector<1x8x256xf32>
    tpu.vector_store %arg4[%c0_17, %c32, %c0_18], %46 {strides = array<i32>} : memref<1x41x256xf32, #tpu.memory_space<vmem>>, vector<1x8x256xf32>,
    %48 = vector.extract_strided_slice %8 {offsets = [0, 0, 0], sizes = [1, 1, 256], strides = [1, 1, 1]} : vector<1x8x256xf32> to vector<1x1x256xf32>
    %49 = vector.extract_strided_slice %5 {offsets = [19, 0], sizes = [1, 1], strides = [1, 1]} : vector<20x1xf32> to vector<1x1xf32>
    %50 = vector.shape_cast %49 : vector<1x1xf32> to vector<1x1x1xf32>
    %51 = vector.broadcast %50 : vector<1x1x1xf32> to vector<1x1x256xf32>
    %52 = arith.mulf %48, %51 : vector<1x1x256xf32>
    %53 = math.cos %52 : vector<1x1x256xf32>
    %c0_19 = arith.constant 0 : index
    %c40 = arith.constant 40 : index
    %c0_20 = arith.constant 0 : index
    %54 = vector.load %arg4[%c0_19, %c40, %c0_20] : memref<1x41x256xf32, #tpu.memory_space<vmem>>, vector<1x1x256xf32>
    tpu.vector_store %arg4[%c0_19, %c40, %c0_20], %53 {strides = array<i32>} : memref<1x41x256xf32, #tpu.memory_space<vmem>>, vector<1x1x256xf32>,
    return
  }
  func.func @transform_0(%arg0: i32, %arg1: i32) -> (i32, i32) {
    %c0_i32 = arith.constant 0 : i32
    %c0_i32_0 = arith.constant 0 : i32
    %c0_i32_1 = arith.constant 0 : i32
    return %c0_i32, %c0_i32_0 : i32, i32
  }
  func.func @transform_1(%arg0: i32, %arg1: i32) -> (i32, i32, i32) {
    %c0_i32 = arith.constant 0 : i32
    %c0_i32_0 = arith.constant 0 : i32
    return %arg0, %c0_i32, %arg1 : i32, i32, i32
  }
  func.func @transform_2(%arg0: i32, %arg1: i32) -> (i32, i32, i32) {
    %c0_i32 = arith.constant 0 : i32
    %c0_i32_0 = arith.constant 0 : i32
    return %arg0, %c0_i32, %arg1 : i32, i32, i32
  }
}

</mosaic_0001>

<llo_original>
// kernel: tpu_custom_call.1
$region0: #{tpu_custom_call.1}
  #allocation0 [shape = 'u32[]', space=smem, size = 0x4, offset = 0x4, fixed_abs, tag = 'smem constant byte address 0x4 - core index']
  #allocation1 [shape = 'u32[144,128]{1,0:T(1,128)}', space=vmem, size = 0x12000, scoped, tag = 'internal scratch']
  %s0 = inlined_call_operand.vmem [shape: f32[20,1], index: 0, kind: input, shape index: {}]
  %s1 = inlined_call_operand.vmem [shape: f32[2,1,1024], index: 1, kind: input, shape index: {}]
  %s2 = inlined_call_operand.vmem [shape: f32[2,41,1024], index: 2, kind: output, shape index: {}]
  %s3 = sld [smem:[#allocation0]]
  $region60: #{tpu_custom_call.1} parent=0
    _
  %s5 = ssub.s32 1, %s3
  %s6 = scalar_select 0, %s5, %s3
  $region1: #{tpu_custom_call.1} parent=0
    #allocation2 [shape = 'u8[98304]{0}', space=vmem, size = 0x18000, scoped, tag = 'output window, operand 0']
    loop: start=0, step=1, limit=10
    $region2: #{tpu_custom_call.1} parent=1 // loop_pre_header
      _
    $region3: #{tpu_custom_call.1} parent=1 // loop_header
      %s8 = sphi 0, %s12
      %p9 = scmp.ge.s32.totalorder %s8, 10
      %s15 = sphi 0, %s27
      %s16 = sphi 0, %s23
      %s17 = sphi 0, %s15
      %s18 = sphi 0, %s16
      %s19 = sphi 0, %s17
      %s20 = sphi 0, %s18
      %s28 = sphi 0, %s28
      %s30 = sphi 0, %s28
      %s31 = sphi 0, %s30
      %s45 = sphi 0, %s31
      %s53 = sphi 0, %s55
      %s56 = sphi 0, %s53
      %s57 = sphi 0, %s56
      %s73 = sphi 0, %s57
      %s81 = sphi 0, %s83
      %s84 = sphi 0, %s81
      %s85 = sphi 0, %s84
      %s101 = sphi 0, %s85
    $region4: #{tpu_custom_call.1} parent=1 // loop_header_branch
      %11 = sbr.rel (%p9) target = $region8
    $region5: #{tpu_custom_call.1} parent=1 // loop_body
      %s13 = ssub.s32 %s8, 1
      %s14 = ssub.s32 %s8, 2
      %s21 = sadd.s32 1, %s16
      %p22 = scmp.ge.s32.totalorder %s21, 4
      %s23 = scalar_select %p22, 0, %s21
      %s24 = sadd.s32 1, %s15
      %s25 = scalar_select %p22, %s24, %s15
      %p26 = scmp.ge.s32.totalorder %s25, 2
      %s27 = scalar_select %p26, 0, %s25
      %s29 = sadd.s32 %s28, 1
      %p32 = scmp.eq.s32.totalorder %s8, 7
      %p33 = scmp.ne.s32.totalorder %s28, %s30
      %p34 = scmp.eq.s32.totalorder %s8, 0
      %p35 = por %p33, %p34
      %p36 = scmp.ne.s32.totalorder %s28, %s30
      %p37 = scmp.eq.s32.totalorder %s13, 7
      %p38 = por %p36, %p37
      %p39 = scmp.ne.s32.totalorder %s30, %s31
      %p40 = scmp.eq.s32.totalorder %s13, 0
      %p41 = por %p39, %p40
      %p42 = scmp.ne.s32.totalorder %s30, %s31
      %p43 = scmp.eq.s32.totalorder %s14, 7
      %p44 = por %p42, %p43
      %p46 = scmp.ne.s32.totalorder %s31, %s45
      %p47 = scmp.eq.s32.totalorder %s14, 0
      %p48 = por %p46, %p47
      %s49 = ssub.s32 %s15, %s27
      %s50 = ssub.s32 %s16, %s23
      %s51 = sor.u32 %s49, %s50
      %p52 = scmp.eq.s32.totalorder %s51, 0
      %s54 = sadd.s32 %s53, 1
      %s55 = scalar_select %p52, %s53, %s54
      %p58 = pneg %p52
      %p59 = scmp.eq.s32.totalorder %s8, 7
      %p60 = por %p58, %p59
      %p61 = scmp.ne.s32.totalorder %s53, %s56
      %p62 = scmp.eq.s32.totalorder %s8, 0
      %p63 = por %p61, %p62
      %p64 = scmp.ne.s32.totalorder %s53, %s56
      %p65 = scmp.eq.s32.totalorder %s13, 7
      %p66 = por %p64, %p65
      %p67 = scmp.ne.s32.totalorder %s56, %s57
      %p68 = scmp.eq.s32.totalorder %s13, 0
      %p69 = por %p67, %p68
      %p70 = scmp.ne.s32.totalorder %s56, %s57
      %p71 = scmp.eq.s32.totalorder %s14, 7
      %p72 = por %p70, %p71
      %p74 = scmp.ne.s32.totalorder %s57, %s73
      %p75 = scmp.eq.s32.totalorder %s14, 0
      %p76 = por %p74, %p75
      %s77 = ssub.s32 %s15, %s27
      %s78 = ssub.s32 %s16, %s23
      %s79 = sor.u32 %s77, %s78
      %p80 = scmp.eq.s32.totalorder %s79, 0
      %s82 = sadd.s32 %s81, 1
      %s83 = scalar_select %p80, %s81, %s82
      %p86 = pneg %p80
      %p87 = scmp.eq.s32.totalorder %s8, 7
      %p88 = por %p86, %p87
      %p89 = scmp.ne.s32.totalorder %s81, %s84
      %p90 = scmp.eq.s32.totalorder %s8, 0
      %p91 = por %p89, %p90
      %p92 = scmp.ne.s32.totalorder %s81, %s84
      %p93 = scmp.eq.s32.totalorder %s13, 7
      %p94 = por %p92, %p93
      %p95 = scmp.ne.s32.totalorder %s84, %s85
      %p96 = scmp.eq.s32.totalorder %s13, 0
      %p97 = por %p95, %p96
      %p98 = scmp.ne.s32.totalorder %s84, %s85
      %p99 = scmp.eq.s32.totalorder %s14, 7
      %p100 = por %p98, %p99
      %p102 = scmp.ne.s32.totalorder %s85, %s101
      %p103 = scmp.eq.s32.totalorder %s14, 0
      %p104 = por %p102, %p103
      %p105 = scmp.le.s32.totalorder 1, %s8
      %p106 = scmp.lt.s32.totalorder %s8, 9
      %p107 = pnand %p105, %p106
      %p108 = pneg %p107
      // Predicated region
      $region9: #{tpu_custom_call.1} parent=5 // pred_check
        _
      $region10: #{tpu_custom_call.1} parent=5 // pred_check_branch
        %110 = sbr.rel (%p107) target = $region12
      $region11: #{tpu_custom_call.1} parent=5 // pred_region
        %s111 = ssub.s32 %s8, 1
        // Predicated region
        $region13: #{tpu_custom_call.1} parent=11 // pred_check
          %p112 = pneg %p41
        $region14: #{tpu_custom_call.1} parent=11 // pred_check_branch
          %114 = sbr.rel (%p112) target = $region16
        $region15: #{tpu_custom_call.1} parent=11 // pred_region
          _
        $region16: #{tpu_custom_call.1} parent=11 // pred_fallthru
          _
      $region12: #{tpu_custom_call.1} parent=5 // pred_fallthru
        _
      %p115 = scmp.lt.s32.totalorder %s8, 8
      // Predicated region
      $region17: #{tpu_custom_call.1} parent=5 // pred_check
        %p116 = pneg %p115
      $region18: #{tpu_custom_call.1} parent=5 // pred_check_branch
        %118 = sbr.rel (%p116) target = $region20
      $region19: #{tpu_custom_call.1} parent=5 // pred_region
        // Predicated region
        $region21: #{tpu_custom_call.1} parent=19 // pred_check
          %p119 = pneg %p63
        $region22: #{tpu_custom_call.1} parent=19 // pred_check_branch
          %121 = sbr.rel (%p119) target = $region24
        $region23: #{tpu_custom_call.1} parent=19 // pred_region
          %s122 = smul.u32 2, %s16
          %p123 = scmp.lt.s32.totalorder %s15, 1
          %s124 = scalar_select %p123, %s15, 1
          %p125 = scmp.lt.s32.totalorder %s122, 7
          %s126 = scalar_select %p125, %s122, 7
          %s127 = smul.addr %s124, 8
          %s128 = sadd.s32 %s126, %s127
          %s129 = scalar_lea.vmem %s1, %s128
          %s130 = smul.u32 2, %s16
        $region24: #{tpu_custom_call.1} parent=19 // pred_fallthru
          _
      $region20: #{tpu_custom_call.1} parent=5 // pred_fallthru
        _
      %p131 = scmp.le.s32.totalorder 1, %s8
      %p132 = scmp.lt.s32.totalorder %s8, 9
      %p133 = pnand %p131, %p132
      %p134 = pneg %p133
      // Predicated region
      $region25: #{tpu_custom_call.1} parent=5 // pred_check
        _
      $region26: #{tpu_custom_call.1} parent=5 // pred_check_branch
        %136 = sbr.rel (%p133) target = $region28
      $region27: #{tpu_custom_call.1} parent=5 // pred_region
        %s137 = ssub.s32 %s8, 1
        %p138 = pneg %p41
        %p139 = pneg %p38
        %s140 = smul.u32 2, %s18
        %p141 = scmp.lt.s32.totalorder %s17, 1
        %s142 = scalar_select %p141, %s17, 1
        %p143 = scmp.lt.s32.totalorder %s140, 7
        %s144 = scalar_select %p143, %s140, 7
        %s145 = smul.addr %s142, 8
        %s146 = sadd.s32 %s144, %s145
        %s147 = scalar_lea.vmem %s1, %s146
        %p148 = pneg %p69
        %p149 = pneg %p66
        %p150 = pneg %p97
        %p151 = pneg %p94
        %s152 = sand.u32 %s84, 1
        %s153 = sand.u32 %s84, 1
        %s154 = smul.addr %s153, 96
        %s155 = scalar_lea.vmem [#allocation2], %s154
        %s156 = smul.u32 2, %s18
        %p157 = scmp.lt.s32.totalorder %s17, 1
        %s158 = scalar_select %p157, %s17, 1
        %p159 = scmp.lt.s32.totalorder %s156, 7
        %s160 = scalar_select %p159, %s156, 7
        %s161 = smul.addr %s158, 8
        %s162 = sadd.s32 %s160, %s161
        %s163 = scalar_lea.vmem %s1, %s162
        %s164 = smul.u32 2, %s18
        %s165 = smul.u32 2, %s18
        %v166 = vld [vmem:[%s163] sm:$0x3]
        %v167 = vlaneseq
        %vm168 = vcmp.ge.s32.totalorder %v167, 0
        %vm169 = vcmp.lt.s32.totalorder %v167, 256
        %vm170 = vmand %vm168, %vm169
        %171 = vst.msk [vmem:[%s155] ss:$8 sm:$0x3] %vm170, %v166
        %172 = vst.msk [vmem:[%s155] ss:$8 sm:$0x0] %vm170, %v166
        %v173 = vld [vmem:[%s0] sm:$0xff]
        %v174 = vld [vmem:[%s0 + $0x8] sm:$0xff]
        %v175 = vld [vmem:[%s0 + $0x10] sm:$0xf]
        %v177 = vlaneseq
        %v178 = vshrl.u32 %v177, 7
        %v179 = vsub.s32 0, %v178
        %v180 = vrot.slane %v166, %v179
        %v181 = vlaneseq
        %v182 = vshrl.u32 %v181, 7
        %v183 = vsub.s32 1, %v182
        %v184 = vrot.slane %v166, %v183
        %188 = vset.pattern.permute.xlu0 0
        %189 = vperm.xlu0 %188, %v173
        %v190 = vpop.permute.xlu0 %189
        %v192 = vmul.f32 %v180, %v190
        %v193 = vmul.f32 %v184, %v190
        %v194 = vand.u32 2147483647, %v192
        %vm195 = vcmp.le.f32.partialorder %v194, 0.7853982
        %vm196 = vcmp.lt.s32.totalorder %v192, 0
        %v197 = vand.u32 %v192, 2139095040
        %v198 = vshrl.u32 %v197, 23
        %v199 = vsub.s32 %v198, 127
        %v200 = vand.u32 2147483647, %v192
        %v201 = vand.u32 %v200, 8388607
        %v202 = vor.u32 %v201, 8388608
        %v203 = vsub.s32 0, %v202
        %v204 = vadd.s32 %v199, 1
        %vm205 = vcmp.gt.s32.totalorder %v204, 0
        %v206 = vsel %vm205, %v204, 0
        %v207 = vshrl.u32 %v206, 5
        %v208 = vand.u32 %v206, 31
        %v209 = vsub.s32 32, %v208
        %v210 = vshrl.u32 683565275, %v209
        %v211 = vshll.u32 683565275, %v208
        %v212 = vshrl.u32 2475754826, %v209
        %v213 = vor.u32 %v211, %v212
        %v214 = vshll.u32 2475754826, %v208
        %v215 = vshrl.u32 2131351028, %v209
        %v216 = vor.u32 %v214, %v215
        %v217 = vshll.u32 2131351028, %v208
        %v218 = vshrl.u32 2102212464, %v209
        %v219 = vor.u32 %v217, %v218
        %v220 = vshll.u32 2102212464, %v208
        %v221 = vshrl.u32 920167782, %v209
        %v222 = vor.u32 %v220, %v221
        %v223 = vshll.u32 920167782, %v208
        %v224 = vshrl.u32 1326507024, %v209
        %v225 = vor.u32 %v223, %v224
        %vm226 = vcmp.lt.s32.totalorder %v207, 1
        %vm227 = vcmp.lt.s32.totalorder %v207, 2
        %vm228 = vcmp.lt.s32.totalorder %v207, 3
        %vm229 = vcmp.lt.s32.totalorder %v207, 4
        %v230 = vsel %vm226, %v210, %v213
        %v231 = vsel %vm229, %v219, 2102212464
        %v232 = vsel %vm228, %v216, %v231
        %v233 = vsel %vm227, %v230, %v232
        %v234 = vsel %vm226, %v213, %v216
        %v235 = vsel %vm229, %v222, 920167782
        %v236 = vsel %vm228, %v219, %v235
        %v237 = vsel %vm227, %v234, %v236
        %v238 = vsel %vm226, %v216, %v219
        %v239 = vsel %vm229, %v225, 1326507024
        %v240 = vsel %vm228, %v222, %v239
        %v241 = vsel %vm227, %v238, %v240
        %v242 = vshll.u32 %v202, 8
        %v243 = vmul.u32.u64.compose %v242, %v241
        %v244 = vextract.low.u32 %v243
        %v245 = vextract.high.u32 %v243
        %v246 = vmul.u32.u64.compose %v242, %v237
        %v247 = vextract.low.u32 %v246
        %v248 = vextract.high.u32 %v246
        %v249 = vmul.u32 %v242, %v233
        %v250 = vadd.s32 %v245, %v247
        %vm251 = vc.u32 %v245, %v247
        %v252 = vadd.s32 %v248, 1
        %v253 = vsel %vm251, %v252, %v248
        %v254 = vadd.s32 %v249, %v253
        %v255 = vadd.s32 %v254, 536870912
        %v256 = vshrl.u32 %v255, 30
        %v257 = vshll.u32 %v256, 30
        %v258 = vsub.s32 %v254, %v257
        %vm259 = vcmp.lt.s32.totalorder %v258, 0
        %v260 = vsub.s32 0, %v258
        %v261 = vsel %vm259, %v260, %v258
        %v262 = vclz %v261
        %v263 = vsub.s32 %v262, 2
        %vm264 = vcmp.gt.s32.totalorder 0, %v263
        %v265 = vsel %vm264, 0, %v263
        %v266 = vsub.s32 32, %v265
        %v267 = vshll.u32 %v258, %v265
        %v268 = vshrl.u32 %v250, %v266
        %v269 = vor.u32 %v267, %v268
        %v270 = vsub.s32 4294967266, %v265
        %v271 = vadd.s32 %v270, 127
        %v272 = vshll.u32 %v271, 23
        %v273 = vor.u32 4788187, %v272
        %v274 = vand.u32 2147483647, %v273
        %v276 = vcvt.s32.f32 %v269
        %v277 = vmul.f32 %v276, %v274
        %v278 = vxor.u32 %v277, 2147483648
        %v279 = vsel %vm196, %v278, %v277
        %v280 = vsub.s32 4, %v256
        %v281 = vsel %vm196, %v280, %v256
        %v282 = vsel %vm195, %v192, %v279
        %v283 = vsel %vm195, 0, %v281
        %v284 = vcosq.f32.pop %v282
        %v285 = vsinq.f32.pop %v282
        %vm286 = vweird.f32 %v192
        %v287 = vadd.s32 %v283, 3
        %v288 = vand.u32 %v287, 3
        %vm289 = vcmp.lt.s32.totalorder %v288, 2
        %vm290 = vcmp.eq.s32.totalorder %v288, 0
        %v291 = vxor.u32 %v285, 2147483648
        %v292 = vsel %vm290, %v284, %v291
        %vm293 = vcmp.eq.s32.totalorder %v288, 2
        %v294 = vxor.u32 %v284, 2147483648
        %v295 = vsel %vm293, %v294, %v285
        %v296 = vsel %vm289, %v292, %v295
        %v297 = vsel %vm286, nan, %v296
        %v298 = vand.u32 2147483647, %v193
        %vm299 = vcmp.le.f32.partialorder %v298, 0.7853982
        %vm300 = vcmp.lt.s32.totalorder %v193, 0
        %v301 = vand.u32 %v193, 2139095040
        %v302 = vshrl.u32 %v301, 23
        %v303 = vsub.s32 %v302, 127
        %v304 = vand.u32 2147483647, %v193
        %v305 = vand.u32 %v304, 8388607
        %v306 = vor.u32 %v305, 8388608
        %v307 = vsub.s32 0, %v306
        %v308 = vadd.s32 %v303, 1
        %vm309 = vcmp.gt.s32.totalorder %v308, 0
        %v310 = vsel %vm309, %v308, 0
        %v311 = vshrl.u32 %v310, 5
        %v312 = vand.u32 %v310, 31
        %v313 = vsub.s32 32, %v312
        %v314 = vshrl.u32 683565275, %v313
        %v315 = vshll.u32 683565275, %v312
        %v316 = vshrl.u32 2475754826, %v313
        %v317 = vor.u32 %v315, %v316
        %v318 = vshll.u32 2475754826, %v312
        %v319 = vshrl.u32 2131351028, %v313
        %v320 = vor.u32 %v318, %v319
        %v321 = vshll.u32 2131351028, %v312
        %v322 = vshrl.u32 2102212464, %v313
        %v323 = vor.u32 %v321, %v322
        %v324 = vshll.u32 2102212464, %v312
        %v325 = vshrl.u32 920167782, %v313
        %v326 = vor.u32 %v324, %v325
        %v327 = vshll.u32 920167782, %v312
        %v328 = vshrl.u32 1326507024, %v313
        %v329 = vor.u32 %v327, %v328
        %vm330 = vcmp.lt.s32.totalorder %v311, 1
        %vm331 = vcmp.lt.s32.totalorder %v311, 2
        %vm332 = vcmp.lt.s32.totalorder %v311, 3
        %vm333 = vcmp.lt.s32.totalorder %v311, 4
        %v334 = vsel %vm330, %v314, %v317
        %v335 = vsel %vm333, %v323, 2102212464
        %v336 = vsel %vm332, %v320, %v335
        %v337 = vsel %vm331, %v334, %v336
        %v338 = vsel %vm330, %v317, %v320
        %v339 = vsel %vm333, %v326, 920167782
        %v340 = vsel %vm332, %v323, %v339
        %v341 = vsel %vm331, %v338, %v340
        %v342 = vsel %vm330, %v320, %v323
        %v343 = vsel %vm333, %v329, 1326507024
        %v344 = vsel %vm332, %v326, %v343
        %v345 = vsel %vm331, %v342, %v344
        %v346 = vshll.u32 %v306, 8
        %v347 = vmul.u32.u64.compose %v346, %v345
        %v348 = vextract.low.u32 %v347
        %v349 = vextract.high.u32 %v347
        %v350 = vmul.u32.u64.compose %v346, %v341
        %v351 = vextract.low.u32 %v350
        %v352 = vextract.high.u32 %v350
        %v353 = vmul.u32 %v346, %v337
        %v354 = vadd.s32 %v349, %v351
        %vm355 = vc.u32 %v349, %v351
        %v356 = vadd.s32 %v352, 1
        %v357 = vsel %vm355, %v356, %v352
        %v358 = vadd.s32 %v353, %v357
        %v359 = vadd.s32 %v358, 536870912
        %v360 = vshrl.u32 %v359, 30
        %v361 = vshll.u32 %v360, 30
        %v362 = vsub.s32 %v358, %v361
        %vm363 = vcmp.lt.s32.totalorder %v362, 0
        %v364 = vsub.s32 0, %v362
        %v365 = vsel %vm363, %v364, %v362
        %v366 = vclz %v365
        %v367 = vsub.s32 %v366, 2
        %vm368 = vcmp.gt.s32.totalorder 0, %v367
        %v369 = vsel %vm368, 0, %v367
        %v370 = vsub.s32 32, %v369
        %v371 = vshll.u32 %v362, %v369
        %v372 = vshrl.u32 %v354, %v370
        %v373 = vor.u32 %v371, %v372
        %v374 = vsub.s32 4294967266, %v369
        %v375 = vadd.s32 %v374, 127
        %v376 = vshll.u32 %v375, 23
        %v377 = vor.u32 4788187, %v376
        %v378 = vand.u32 2147483647, %v377
        %v380 = vcvt.s32.f32 %v373
        %v381 = vmul.f32 %v380, %v378
        %v382 = vxor.u32 %v381, 2147483648
        %v383 = vsel %vm300, %v382, %v381
        %v384 = vsub.s32 4, %v360
        %v385 = vsel %vm300, %v384, %v360
        %v386 = vsel %vm299, %v193, %v383
        %v387 = vsel %vm299, 0, %v385
        %v388 = vcosq.f32.pop %v386
        %v389 = vsinq.f32.pop %v386
        %vm390 = vweird.f32 %v193
        %v391 = vadd.s32 %v387, 3
        %v392 = vand.u32 %v391, 3
        %vm393 = vcmp.lt.s32.totalorder %v392, 2
        %vm394 = vcmp.eq.s32.totalorder %v392, 0
        %v395 = vxor.u32 %v389, 2147483648
        %v396 = vsel %vm394, %v388, %v395
        %vm397 = vcmp.eq.s32.totalorder %v392, 2
        %v398 = vxor.u32 %v388, 2147483648
        %v399 = vsel %vm397, %v398, %v389
        %v400 = vsel %vm393, %v396, %v399
        %v401 = vsel %vm390, nan, %v400
        %v404 = vrot.slane %v297, 7
        %v405 = vrot.slane %v401, 7
        %408 = vst [vmem:[%s155] sm:$0xfe] %v404
        %409 = vst [vmem:[%s155 + $0x8] sm:$0xfe] %v405
        %411 = vset.pattern.permute.xlu0 0
        %412 = vperm.xlu0 %411, %v174
        %v413 = vpop.permute.xlu0 %412
        %v415 = vmul.f32 %v180, %v413
        %v416 = vmul.f32 %v184, %v413
        %v417 = vand.u32 2147483647, %v415
        %vm418 = vcmp.le.f32.partialorder %v417, 0.7853982
        %vm419 = vcmp.lt.s32.totalorder %v415, 0
        %v420 = vand.u32 %v415, 2139095040
        %v421 = vshrl.u32 %v420, 23
        %v422 = vsub.s32 %v421, 127
        %v423 = vand.u32 2147483647, %v415
        %v424 = vand.u32 %v423, 8388607
        %v425 = vor.u32 %v424, 8388608
        %v426 = vsub.s32 0, %v425
        %v427 = vadd.s32 %v422, 1
        %vm428 = vcmp.gt.s32.totalorder %v427, 0
        %v429 = vsel %vm428, %v427, 0
        %v430 = vshrl.u32 %v429, 5
        %v431 = vand.u32 %v429, 31
        %v432 = vsub.s32 32, %v431
        %v433 = vshrl.u32 683565275, %v432
        %v434 = vshll.u32 683565275, %v431
        %v435 = vshrl.u32 2475754826, %v432
        %v436 = vor.u32 %v434, %v435
        %v437 = vshll.u32 2475754826, %v431
        %v438 = vshrl.u32 2131351028, %v432
        %v439 = vor.u32 %v437, %v438
        %v440 = vshll.u32 2131351028, %v431
        %v441 = vshrl.u32 2102212464, %v432
        %v442 = vor.u32 %v440, %v441
        %v443 = vshll.u32 2102212464, %v431
        %v444 = vshrl.u32 920167782, %v432
        %v445 = vor.u32 %v443, %v444
        %v446 = vshll.u32 920167782, %v431
        %v447 = vshrl.u32 1326507024, %v432
        %v448 = vor.u32 %v446, %v447
        %vm449 = vcmp.lt.s32.totalorder %v430, 1
        %vm450 = vcmp.lt.s32.totalorder %v430, 2
        %vm451 = vcmp.lt.s32.totalorder %v430, 3
        %vm452 = vcmp.lt.s32.totalorder %v430, 4
        %v453 = vsel %vm449, %v433, %v436
        %v454 = vsel %vm452, %v442, 2102212464
        %v455 = vsel %vm451, %v439, %v454
        %v456 = vsel %vm450, %v453, %v455
        %v457 = vsel %vm449, %v436, %v439
        %v458 = vsel %vm452, %v445, 920167782
        %v459 = vsel %vm451, %v442, %v458
        %v460 = vsel %vm450, %v457, %v459
        %v461 = vsel %vm449, %v439, %v442
        %v462 = vsel %vm452, %v448, 1326507024
        %v463 = vsel %vm451, %v445, %v462
        %v464 = vsel %vm450, %v461, %v463
        %v465 = vshll.u32 %v425, 8
        %v466 = vmul.u32.u64.compose %v465, %v464
        %v467 = vextract.low.u32 %v466
        %v468 = vextract.high.u32 %v466
        %v469 = vmul.u32.u64.compose %v465, %v460
        %v470 = vextract.low.u32 %v469
        %v471 = vextract.high.u32 %v469
        %v472 = vmul.u32 %v465, %v456
        %v473 = vadd.s32 %v468, %v470
        %vm474 = vc.u32 %v468, %v470
        %v475 = vadd.s32 %v471, 1
        %v476 = vsel %vm474, %v475, %v471
        %v477 = vadd.s32 %v472, %v476
        %v478 = vadd.s32 %v477, 536870912
        %v479 = vshrl.u32 %v478, 30
        %v480 = vshll.u32 %v479, 30
        %v481 = vsub.s32 %v477, %v480
        %vm482 = vcmp.lt.s32.totalorder %v481, 0
        %v483 = vsub.s32 0, %v481
        %v484 = vsel %vm482, %v483, %v481
        %v485 = vclz %v484
        %v486 = vsub.s32 %v485, 2
        %vm487 = vcmp.gt.s32.totalorder 0, %v486
        %v488 = vsel %vm487, 0, %v486
        %v489 = vsub.s32 32, %v488
        %v490 = vshll.u32 %v481, %v488
        %v491 = vshrl.u32 %v473, %v489
        %v492 = vor.u32 %v490, %v491
        %v493 = vsub.s32 4294967266, %v488
        %v494 = vadd.s32 %v493, 127
        %v495 = vshll.u32 %v494, 23
        %v496 = vor.u32 4788187, %v495
        %v497 = vand.u32 2147483647, %v496
        %v499 = vcvt.s32.f32 %v492
        %v500 = vmul.f32 %v499, %v497
        %v501 = vxor.u32 %v500, 2147483648
        %v502 = vsel %vm419, %v501, %v500
        %v503 = vsub.s32 4, %v479
        %v504 = vsel %vm419, %v503, %v479
        %v505 = vsel %vm418, %v415, %v502
        %v506 = vsel %vm418, 0, %v504
        %v507 = vcosq.f32.pop %v505
        %v508 = vsinq.f32.pop %v505
        %vm509 = vweird.f32 %v415
        %v510 = vadd.s32 %v506, 3
        %v511 = vand.u32 %v510, 3
        %vm512 = vcmp.lt.s32.totalorder %v511, 2
        %vm513 = vcmp.eq.s32.totalorder %v511, 0
        %v514 = vxor.u32 %v508, 2147483648
        %v515 = vsel %vm513, %v507, %v514
        %vm516 = vcmp.eq.s32.totalorder %v511, 2
        %v517 = vxor.u32 %v507, 2147483648
        %v518 = vsel %vm516, %v517, %v508
        %v519 = vsel %vm512, %v515, %v518
        %v520 = vsel %vm509, nan, %v519
        %v521 = vand.u32 2147483647, %v416
        %vm522 = vcmp.le.f32.partialorder %v521, 0.7853982
        %vm523 = vcmp.lt.s32.totalorder %v416, 0
        %v524 = vand.u32 %v416, 2139095040
        %v525 = vshrl.u32 %v524, 23
        %v526 = vsub.s32 %v525, 127
        %v527 = vand.u32 2147483647, %v416
        %v528 = vand.u32 %v527, 8388607
        %v529 = vor.u32 %v528, 8388608
        %v530 = vsub.s32 0, %v529
        %v531 = vadd.s32 %v526, 1
        %vm532 = vcmp.gt.s32.totalorder %v531, 0
        %v533 = vsel %vm532, %v531, 0
        %v534 = vshrl.u32 %v533, 5
        %v535 = vand.u32 %v533, 31
        %v536 = vsub.s32 32, %v535
        %v537 = vshrl.u32 683565275, %v536
        %v538 = vshll.u32 683565275, %v535
        %v539 = vshrl.u32 2475754826, %v536
        %v540 = vor.u32 %v538, %v539
        %v541 = vshll.u32 2475754826, %v535
        %v542 = vshrl.u32 2131351028, %v536
        %v543 = vor.u32 %v541, %v542
        %v544 = vshll.u32 2131351028, %v535
        %v545 = vshrl.u32 2102212464, %v536
        %v546 = vor.u32 %v544, %v545
        %v547 = vshll.u32 2102212464, %v535
        %v548 = vshrl.u32 920167782, %v536
        %v549 = vor.u32 %v547, %v548
        %v550 = vshll.u32 920167782, %v535
        %v551 = vshrl.u32 1326507024, %v536
        %v552 = vor.u32 %v550, %v551
        %vm553 = vcmp.lt.s32.totalorder %v534, 1
        %vm554 = vcmp.lt.s32.totalorder %v534, 2
        %vm555 = vcmp.lt.s32.totalorder %v534, 3
        %vm556 = vcmp.lt.s32.totalorder %v534, 4
        %v557 = vsel %vm553, %v537, %v540
        %v558 = vsel %vm556, %v546, 2102212464
        %v559 = vsel %vm555, %v543, %v558
        %v560 = vsel %vm554, %v557, %v559
        %v561 = vsel %vm553, %v540, %v543
        %v562 = vsel %vm556, %v549, 920167782
        %v563 = vsel %vm555, %v546, %v562
        %v564 = vsel %vm554, %v561, %v563
        %v565 = vsel %vm553, %v543, %v546
        %v566 = vsel %vm556, %v552, 1326507024
        %v567 = vsel %vm555, %v549, %v566
        %v568 = vsel %vm554, %v565, %v567
        %v569 = vshll.u32 %v529, 8
        %v570 = vmul.u32.u64.compose %v569, %v568
        %v571 = vextract.low.u32 %v570
        %v572 = vextract.high.u32 %v570
        %v573 = vmul.u32.u64.compose %v569, %v564
        %v574 = vextract.low.u32 %v573
        %v575 = vextract.high.u32 %v573
        %v576 = vmul.u32 %v569, %v560
        %v577 = vadd.s32 %v572, %v574
        %vm578 = vc.u32 %v572, %v574
        %v579 = vadd.s32 %v575, 1
        %v580 = vsel %vm578, %v579, %v575
        %v581 = vadd.s32 %v576, %v580
        %v582 = vadd.s32 %v581, 536870912
        %v583 = vshrl.u32 %v582, 30
        %v584 = vshll.u32 %v583, 30
        %v585 = vsub.s32 %v581, %v584
        %vm586 = vcmp.lt.s32.totalorder %v585, 0
        %v587 = vsub.s32 0, %v585
        %v588 = vsel %vm586, %v587, %v585
        %v589 = vclz %v588
        %v590 = vsub.s32 %v589, 2
        %vm591 = vcmp.gt.s32.totalorder 0, %v590
        %v592 = vsel %vm591, 0, %v590
        %v593 = vsub.s32 32, %v592
        %v594 = vshll.u32 %v585, %v592
        %v595 = vshrl.u32 %v577, %v593
        %v596 = vor.u32 %v594, %v595
        %v597 = vsub.s32 4294967266, %v592
        %v598 = vadd.s32 %v597, 127
        %v599 = vshll.u32 %v598, 23
        %v600 = vor.u32 4788187, %v599
        %v601 = vand.u32 2147483647, %v600
        %v603 = vcvt.s32.f32 %v596
        %v604 = vmul.f32 %v603, %v601
        %v605 = vxor.u32 %v604, 2147483648
        %v606 = vsel %vm523, %v605, %v604
        %v607 = vsub.s32 4, %v583
        %v608 = vsel %vm523, %v607, %v583
        %v609 = vsel %vm522, %v416, %v606
        %v610 = vsel %vm522, 0, %v608
        %v611 = vcosq.f32.pop %v609
        %v612 = vsinq.f32.pop %v609
        %vm613 = vweird.f32 %v416
        %v614 = vadd.s32 %v610, 3
        %v615 = vand.u32 %v614, 3
        %vm616 = vcmp.lt.s32.totalorder %v615, 2
        %vm617 = vcmp.eq.s32.totalorder %v615, 0
        %v618 = vxor.u32 %v612, 2147483648
        %v619 = vsel %vm617, %v611, %v618
        %vm620 = vcmp.eq.s32.totalorder %v615, 2
        %v621 = vxor.u32 %v611, 2147483648
        %v622 = vsel %vm620, %v621, %v612
        %v623 = vsel %vm616, %v619, %v622
        %v624 = vsel %vm613, nan, %v623
        %vm627 = vcmask 1040384
        %v628 = vrot.slane %v520, 7
        %v629 = vsel %vm627, %v404, %v628
        %v630 = vrot.slane %v624, 7
        %v631 = vsel %vm627, %v405, %v630
        %634 = vst [vmem:[%s155 + $0x10] sm:$0xff] %v629
        %635 = vst [vmem:[%s155 + $0x18] sm:$0xff] %v631
        %637 = vset.pattern.permute.xlu0 0
        %638 = vperm.xlu0 %637, %v175
        %v639 = vpop.permute.xlu0 %638
        %v641 = vmul.f32 %v180, %v639
        %v642 = vmul.f32 %v184, %v639
        %v643 = vand.u32 2147483647, %v641
        %vm644 = vcmp.le.f32.partialorder %v643, 0.7853982
        %vm645 = vcmp.lt.s32.totalorder %v641, 0
        %v646 = vand.u32 %v641, 2139095040
        %v647 = vshrl.u32 %v646, 23
        %v648 = vsub.s32 %v647, 127
        %v649 = vand.u32 2147483647, %v641
        %v650 = vand.u32 %v649, 8388607
        %v651 = vor.u32 %v650, 8388608
        %v652 = vsub.s32 0, %v651
        %v653 = vadd.s32 %v648, 1
        %vm654 = vcmp.gt.s32.totalorder %v653, 0
        %v655 = vsel %vm654, %v653, 0
        %v656 = vshrl.u32 %v655, 5
        %v657 = vand.u32 %v655, 31
        %v658 = vsub.s32 32, %v657
        %v659 = vshrl.u32 683565275, %v658
        %v660 = vshll.u32 683565275, %v657
        %v661 = vshrl.u32 2475754826, %v658
        %v662 = vor.u32 %v660, %v661
        %v663 = vshll.u32 2475754826, %v657
        %v664 = vshrl.u32 2131351028, %v658
        %v665 = vor.u32 %v663, %v664
        %v666 = vshll.u32 2131351028, %v657
        %v667 = vshrl.u32 2102212464, %v658
        %v668 = vor.u32 %v666, %v667
        %v669 = vshll.u32 2102212464, %v657
        %v670 = vshrl.u32 920167782, %v658
        %v671 = vor.u32 %v669, %v670
        %v672 = vshll.u32 920167782, %v657
        %v673 = vshrl.u32 1326507024, %v658
        %v674 = vor.u32 %v672, %v673
        %vm675 = vcmp.lt.s32.totalorder %v656, 1
        %vm676 = vcmp.lt.s32.totalorder %v656, 2
        %vm677 = vcmp.lt.s32.totalorder %v656, 3
        %vm678 = vcmp.lt.s32.totalorder %v656, 4
        %v679 = vsel %vm675, %v659, %v662
        %v680 = vsel %vm678, %v668, 2102212464
        %v681 = vsel %vm677, %v665, %v680
        %v682 = vsel %vm676, %v679, %v681
        %v683 = vsel %vm675, %v662, %v665
        %v684 = vsel %vm678, %v671, 920167782
        %v685 = vsel %vm677, %v668, %v684
        %v686 = vsel %vm676, %v683, %v685
        %v687 = vsel %vm675, %v665, %v668
        %v688 = vsel %vm678, %v674, 1326507024
        %v689 = vsel %vm677, %v671, %v688
        %v690 = vsel %vm676, %v687, %v689
        %v691 = vshll.u32 %v651, 8
        %v692 = vmul.u32.u64.compose %v691, %v690
        %v693 = vextract.low.u32 %v692
        %v694 = vextract.high.u32 %v692
        %v695 = vmul.u32.u64.compose %v691, %v686
        %v696 = vextract.low.u32 %v695
        %v697 = vextract.high.u32 %v695
        %v698 = vmul.u32 %v691, %v682
        %v699 = vadd.s32 %v694, %v696
        %vm700 = vc.u32 %v694, %v696
        %v701 = vadd.s32 %v697, 1
        %v702 = vsel %vm700, %v701, %v697
        %v703 = vadd.s32 %v698, %v702
        %v704 = vadd.s32 %v703, 536870912
        %v705 = vshrl.u32 %v704, 30
        %v706 = vshll.u32 %v705, 30
        %v707 = vsub.s32 %v703, %v706
        %vm708 = vcmp.lt.s32.totalorder %v707, 0
        %v709 = vsub.s32 0, %v707
        %v710 = vsel %vm708, %v709, %v707
        %v711 = vclz %v710
        %v712 = vsub.s32 %v711, 2
        %vm713 = vcmp.gt.s32.totalorder 0, %v712
        %v714 = vsel %vm713, 0, %v712
        %v715 = vsub.s32 32, %v714
        %v716 = vshll.u32 %v707, %v714
        %v717 = vshrl.u32 %v699, %v715
        %v718 = vor.u32 %v716, %v717
        %v719 = vsub.s32 4294967266, %v714
        %v720 = vadd.s32 %v719, 127
        %v721 = vshll.u32 %v720, 23
        %v722 = vor.u32 4788187, %v721
        %v723 = vand.u32 2147483647, %v722
        %v725 = vcvt.s32.f32 %v718
        %v726 = vmul.f32 %v725, %v723
        %v727 = vxor.u32 %v726, 2147483648
        %v728 = vsel %vm645, %v727, %v726
        %v729 = vsub.s32 4, %v705
        %v730 = vsel %vm645, %v729, %v705
        %v731 = vsel %vm644, %v641, %v728
        %v732 = vsel %vm644, 0, %v730
        %v733 = vcosq.f32.pop %v731
        %v734 = vsinq.f32.pop %v731
        %vm735 = vweird.f32 %v641
        %v736 = vadd.s32 %v732, 3
        %v737 = vand.u32 %v736, 3
        %vm738 = vcmp.lt.s32.totalorder %v737, 2
        %vm739 = vcmp.eq.s32.totalorder %v737, 0
        %v740 = vxor.u32 %v734, 2147483648
        %v741 = vsel %vm739, %v733, %v740
        %vm742 = vcmp.eq.s32.totalorder %v737, 2
        %v743 = vxor.u32 %v733, 2147483648
        %v744 = vsel %vm742, %v743, %v734
        %v745 = vsel %vm738, %v741, %v744
        %v746 = vsel %vm735, nan, %v745
        %v747 = vand.u32 2147483647, %v642
        %vm748 = vcmp.le.f32.partialorder %v747, 0.7853982
        %vm749 = vcmp.lt.s32.totalorder %v642, 0
        %v750 = vand.u32 %v642, 2139095040
        %v751 = vshrl.u32 %v750, 23
        %v752 = vsub.s32 %v751, 127
        %v753 = vand.u32 2147483647, %v642
        %v754 = vand.u32 %v753, 8388607
        %v755 = vor.u32 %v754, 8388608
        %v756 = vsub.s32 0, %v755
        %v757 = vadd.s32 %v752, 1
        %vm758 = vcmp.gt.s32.totalorder %v757, 0
        %v759 = vsel %vm758, %v757, 0
        %v760 = vshrl.u32 %v759, 5
        %v761 = vand.u32 %v759, 31
        %v762 = vsub.s32 32, %v761
        %v763 = vshrl.u32 683565275, %v762
        %v764 = vshll.u32 683565275, %v761
        %v765 = vshrl.u32 2475754826, %v762
        %v766 = vor.u32 %v764, %v765
        %v767 = vshll.u32 2475754826, %v761
        %v768 = vshrl.u32 2131351028, %v762
        %v769 = vor.u32 %v767, %v768
        %v770 = vshll.u32 2131351028, %v761
        %v771 = vshrl.u32 2102212464, %v762
        %v772 = vor.u32 %v770, %v771
        %v773 = vshll.u32 2102212464, %v761
        %v774 = vshrl.u32 920167782, %v762
        %v775 = vor.u32 %v773, %v774
        %v776 = vshll.u32 920167782, %v761
        %v777 = vshrl.u32 1326507024, %v762
        %v778 = vor.u32 %v776, %v777
        %vm779 = vcmp.lt.s32.totalorder %v760, 1
        %vm780 = vcmp.lt.s32.totalorder %v760, 2
        %vm781 = vcmp.lt.s32.totalorder %v760, 3
        %vm782 = vcmp.lt.s32.totalorder %v760, 4
        %v783 = vsel %vm779, %v763, %v766
        %v784 = vsel %vm782, %v772, 2102212464
        %v785 = vsel %vm781, %v769, %v784
        %v786 = vsel %vm780, %v783, %v785
        %v787 = vsel %vm779, %v766, %v769
        %v788 = vsel %vm782, %v775, 920167782
        %v789 = vsel %vm781, %v772, %v788
        %v790 = vsel %vm780, %v787, %v789
        %v791 = vsel %vm779, %v769, %v772
        %v792 = vsel %vm782, %v778, 1326507024
        %v793 = vsel %vm781, %v775, %v792
        %v794 = vsel %vm780, %v791, %v793
        %v795 = vshll.u32 %v755, 8
        %v796 = vmul.u32.u64.compose %v795, %v794
        %v797 = vextract.low.u32 %v796
        %v798 = vextract.high.u32 %v796
        %v799 = vmul.u32.u64.compose %v795, %v790
        %v800 = vextract.low.u32 %v799
        %v801 = vextract.high.u32 %v799
        %v802 = vmul.u32 %v795, %v786
        %v803 = vadd.s32 %v798, %v800
        %vm804 = vc.u32 %v798, %v800
        %v805 = vadd.s32 %v801, 1
        %v806 = vsel %vm804, %v805, %v801
        %v807 = vadd.s32 %v802, %v806
        %v808 = vadd.s32 %v807, 536870912
        %v809 = vshrl.u32 %v808, 30
        %v810 = vshll.u32 %v809, 30
        %v811 = vsub.s32 %v807, %v810
        %vm812 = vcmp.lt.s32.totalorder %v811, 0
        %v813 = vsub.s32 0, %v811
        %v814 = vsel %vm812, %v813, %v811
        %v815 = vclz %v814
        %v816 = vsub.s32 %v815, 2
        %vm817 = vcmp.gt.s32.totalorder 0, %v816
        %v818 = vsel %vm817, 0, %v816
        %v819 = vsub.s32 32, %v818
        %v820 = vshll.u32 %v811, %v818
        %v821 = vshrl.u32 %v803, %v819
        %v822 = vor.u32 %v820, %v821
        %v823 = vsub.s32 4294967266, %v818
        %v824 = vadd.s32 %v823, 127
        %v825 = vshll.u32 %v824, 23
        %v826 = vor.u32 4788187, %v825
        %v827 = vand.u32 2147483647, %v826
        %v829 = vcvt.s32.f32 %v822
        %v830 = vmul.f32 %v829, %v827
        %v831 = vxor.u32 %v830, 2147483648
        %v832 = vsel %vm749, %v831, %v830
        %v833 = vsub.s32 4, %v809
        %v834 = vsel %vm749, %v833, %v809
        %v835 = vsel %vm748, %v642, %v832
        %v836 = vsel %vm748, 0, %v834
        %v837 = vcosq.f32.pop %v835
        %v838 = vsinq.f32.pop %v835
        %vm839 = vweird.f32 %v642
        %v840 = vadd.s32 %v836, 3
        %v841 = vand.u32 %v840, 3
        %vm842 = vcmp.lt.s32.totalorder %v841, 2
        %vm843 = vcmp.eq.s32.totalorder %v841, 0
        %v844 = vxor.u32 %v838, 2147483648
        %v845 = vsel %vm843, %v837, %v844
        %vm846 = vcmp.eq.s32.totalorder %v841, 2
        %v847 = vxor.u32 %v837, 2147483648
        %v848 = vsel %vm846, %v847, %v838
        %v849 = vsel %vm842, %v845, %v848
        %v850 = vsel %vm839, nan, %v849
        %v853 = vrot.slane %v746, 7
        %v854 = vsel %vm627, %v628, %v853
        %v855 = vrot.slane %v850, 7
        %v856 = vsel %vm627, %v630, %v855
        %859 = vst [vmem:[%s155 + $0x20] sm:$0x1f] %v854
        %860 = vst [vmem:[%s155 + $0x28] sm:$0x1f] %v856
        %v861 = vand.u32 2147483647, %v192
        %vm862 = vcmp.le.f32.partialorder %v861, 0.7853982
        %vm863 = vcmp.lt.s32.totalorder %v192, 0
        %v864 = vand.u32 %v192, 2139095040
        %v865 = vshrl.u32 %v864, 23
        %v866 = vsub.s32 %v865, 127
        %v867 = vand.u32 2147483647, %v192
        %v868 = vand.u32 %v867, 8388607
        %v869 = vor.u32 %v868, 8388608
        %v870 = vsub.s32 0, %v869
        %v871 = vadd.s32 %v866, 1
        %vm872 = vcmp.gt.s32.totalorder %v871, 0
        %v873 = vsel %vm872, %v871, 0
        %v874 = vshrl.u32 %v873, 5
        %v875 = vand.u32 %v873, 31
        %v876 = vsub.s32 32, %v875
        %v877 = vshrl.u32 683565275, %v876
        %v878 = vshll.u32 683565275, %v875
        %v879 = vshrl.u32 2475754826, %v876
        %v880 = vor.u32 %v878, %v879
        %v881 = vshll.u32 2475754826, %v875
        %v882 = vshrl.u32 2131351028, %v876
        %v883 = vor.u32 %v881, %v882
        %v884 = vshll.u32 2131351028, %v875
        %v885 = vshrl.u32 2102212464, %v876
        %v886 = vor.u32 %v884, %v885
        %v887 = vshll.u32 2102212464, %v875
        %v888 = vshrl.u32 920167782, %v876
        %v889 = vor.u32 %v887, %v888
        %v890 = vshll.u32 920167782, %v875
        %v891 = vshrl.u32 1326507024, %v876
        %v892 = vor.u32 %v890, %v891
        %vm893 = vcmp.lt.s32.totalorder %v874, 1
        %vm894 = vcmp.lt.s32.totalorder %v874, 2
        %vm895 = vcmp.lt.s32.totalorder %v874, 3
        %vm896 = vcmp.lt.s32.totalorder %v874, 4
        %v897 = vsel %vm893, %v877, %v880
        %v898 = vsel %vm896, %v886, 2102212464
        %v899 = vsel %vm895, %v883, %v898
        %v900 = vsel %vm894, %v897, %v899
        %v901 = vsel %vm893, %v880, %v883
        %v902 = vsel %vm896, %v889, 920167782
        %v903 = vsel %vm895, %v886, %v902
        %v904 = vsel %vm894, %v901, %v903
        %v905 = vsel %vm893, %v883, %v886
        %v906 = vsel %vm896, %v892, 1326507024
        %v907 = vsel %vm895, %v889, %v906
        %v908 = vsel %vm894, %v905, %v907
        %v909 = vshll.u32 %v869, 8
        %v910 = vmul.u32.u64.compose %v909, %v908
        %v911 = vextract.low.u32 %v910
        %v912 = vextract.high.u32 %v910
        %v913 = vmul.u32.u64.compose %v909, %v904
        %v914 = vextract.low.u32 %v913
        %v915 = vextract.high.u32 %v913
        %v916 = vmul.u32 %v909, %v900
        %v917 = vadd.s32 %v912, %v914
        %vm918 = vc.u32 %v912, %v914
        %v919 = vadd.s32 %v915, 1
        %v920 = vsel %vm918, %v919, %v915
        %v921 = vadd.s32 %v916, %v920
        %v922 = vadd.s32 %v921, 536870912
        %v923 = vshrl.u32 %v922, 30
        %v924 = vshll.u32 %v923, 30
        %v925 = vsub.s32 %v921, %v924
        %vm926 = vcmp.lt.s32.totalorder %v925, 0
        %v927 = vsub.s32 0, %v925
        %v928 = vsel %vm926, %v927, %v925
        %v929 = vclz %v928
        %v930 = vsub.s32 %v929, 2
        %vm931 = vcmp.gt.s32.totalorder 0, %v930
        %v932 = vsel %vm931, 0, %v930
        %v933 = vsub.s32 32, %v932
        %v934 = vshll.u32 %v925, %v932
        %v935 = vshrl.u32 %v917, %v933
        %v936 = vor.u32 %v934, %v935
        %v937 = vsub.s32 4294967266, %v932
        %v938 = vadd.s32 %v937, 127
        %v939 = vshll.u32 %v938, 23
        %v940 = vor.u32 4788187, %v939
        %v941 = vand.u32 2147483647, %v940
        %v943 = vcvt.s32.f32 %v936
        %v944 = vmul.f32 %v943, %v941
        %v945 = vxor.u32 %v944, 2147483648
        %v946 = vsel %vm863, %v945, %v944
        %v947 = vsub.s32 4, %v923
        %v948 = vsel %vm863, %v947, %v923
        %v949 = vsel %vm862, %v192, %v946
        %v950 = vsel %vm862, 0, %v948
        %v951 = vcosq.f32.pop %v949
        %v952 = vsinq.f32.pop %v949
        %vm953 = vweird.f32 %v192
        %v954 = vand.u32 %v950, 3
        %vm955 = vcmp.lt.s32.totalorder %v954, 2
        %vm956 = vcmp.eq.s32.totalorder %v954, 0
        %v957 = vxor.u32 %v952, 2147483648
        %v958 = vsel %vm956, %v951, %v957
        %vm959 = vcmp.eq.s32.totalorder %v954, 2
        %v960 = vxor.u32 %v951, 2147483648
        %v961 = vsel %vm959, %v960, %v952
        %v962 = vsel %vm955, %v958, %v961
        %v963 = vsel %vm953, nan, %v962
        %v964 = vand.u32 2147483647, %v193
        %vm965 = vcmp.le.f32.partialorder %v964, 0.7853982
        %vm966 = vcmp.lt.s32.totalorder %v193, 0
        %v967 = vand.u32 %v193, 2139095040
        %v968 = vshrl.u32 %v967, 23
        %v969 = vsub.s32 %v968, 127
        %v970 = vand.u32 2147483647, %v193
        %v971 = vand.u32 %v970, 8388607
        %v972 = vor.u32 %v971, 8388608
        %v973 = vsub.s32 0, %v972
        %v974 = vadd.s32 %v969, 1
        %vm975 = vcmp.gt.s32.totalorder %v974, 0
        %v976 = vsel %vm975, %v974, 0
        %v977 = vshrl.u32 %v976, 5
        %v978 = vand.u32 %v976, 31
        %v979 = vsub.s32 32, %v978
        %v980 = vshrl.u32 683565275, %v979
        %v981 = vshll.u32 683565275, %v978
        %v982 = vshrl.u32 2475754826, %v979
        %v983 = vor.u32 %v981, %v982
        %v984 = vshll.u32 2475754826, %v978
        %v985 = vshrl.u32 2131351028, %v979
        %v986 = vor.u32 %v984, %v985
        %v987 = vshll.u32 2131351028, %v978
        %v988 = vshrl.u32 2102212464, %v979
        %v989 = vor.u32 %v987, %v988
        %v990 = vshll.u32 2102212464, %v978
        %v991 = vshrl.u32 920167782, %v979
        %v992 = vor.u32 %v990, %v991
        %v993 = vshll.u32 920167782, %v978
        %v994 = vshrl.u32 1326507024, %v979
        %v995 = vor.u32 %v993, %v994
        %vm996 = vcmp.lt.s32.totalorder %v977, 1
        %vm997 = vcmp.lt.s32.totalorder %v977, 2
        %vm998 = vcmp.lt.s32.totalorder %v977, 3
        %vm999 = vcmp.lt.s32.totalorder %v977, 4
        %v1000 = vsel %vm996, %v980, %v983
        %v1001 = vsel %vm999, %v989, 2102212464
        %v1002 = vsel %vm998, %v986, %v1001
        %v1003 = vsel %vm997, %v1000, %v1002
        %v1004 = vsel %vm996, %v983, %v986
        %v1005 = vsel %vm999, %v992, 920167782
        %v1006 = vsel %vm998, %v989, %v1005
        %v1007 = vsel %vm997, %v1004, %v1006
        %v1008 = vsel %vm996, %v986, %v989
        %v1009 = vsel %vm999, %v995, 1326507024
        %v1010 = vsel %vm998, %v992, %v1009
        %v1011 = vsel %vm997, %v1008, %v1010
        %v1012 = vshll.u32 %v972, 8
        %v1013 = vmul.u32.u64.compose %v1012, %v1011
        %v1014 = vextract.low.u32 %v1013
        %v1015 = vextract.high.u32 %v1013
        %v1016 = vmul.u32.u64.compose %v1012, %v1007
        %v1017 = vextract.low.u32 %v1016
        %v1018 = vextract.high.u32 %v1016
        %v1019 = vmul.u32 %v1012, %v1003
        %v1020 = vadd.s32 %v1015, %v1017
        %vm1021 = vc.u32 %v1015, %v1017
        %v1022 = vadd.s32 %v1018, 1
        %v1023 = vsel %vm1021, %v1022, %v1018
        %v1024 = vadd.s32 %v1019, %v1023
        %v1025 = vadd.s32 %v1024, 536870912
        %v1026 = vshrl.u32 %v1025, 30
        %v1027 = vshll.u32 %v1026, 30
        %v1028 = vsub.s32 %v1024, %v1027
        %vm1029 = vcmp.lt.s32.totalorder %v1028, 0
        %v1030 = vsub.s32 0, %v1028
        %v1031 = vsel %vm1029, %v1030, %v1028
        %v1032 = vclz %v1031
        %v1033 = vsub.s32 %v1032, 2
        %vm1034 = vcmp.gt.s32.totalorder 0, %v1033
        %v1035 = vsel %vm1034, 0, %v1033
        %v1036 = vsub.s32 32, %v1035
        %v1037 = vshll.u32 %v1028, %v1035
        %v1038 = vshrl.u32 %v1020, %v1036
        %v1039 = vor.u32 %v1037, %v1038
        %v1040 = vsub.s32 4294967266, %v1035
        %v1041 = vadd.s32 %v1040, 127
        %v1042 = vshll.u32 %v1041, 23
        %v1043 = vor.u32 4788187, %v1042
        %v1044 = vand.u32 2147483647, %v1043
        %v1046 = vcvt.s32.f32 %v1039
        %v1047 = vmul.f32 %v1046, %v1044
        %v1048 = vxor.u32 %v1047, 2147483648
        %v1049 = vsel %vm966, %v1048, %v1047
        %v1050 = vsub.s32 4, %v1026
        %v1051 = vsel %vm966, %v1050, %v1026
        %v1052 = vsel %vm965, %v193, %v1049
        %v1053 = vsel %vm965, 0, %v1051
        %v1054 = vcosq.f32.pop %v1052
        %v1055 = vsinq.f32.pop %v1052
        %vm1056 = vweird.f32 %v193
        %v1057 = vand.u32 %v1053, 3
        %vm1058 = vcmp.lt.s32.totalorder %v1057, 2
        %vm1059 = vcmp.eq.s32.totalorder %v1057, 0
        %v1060 = vxor.u32 %v1055, 2147483648
        %v1061 = vsel %vm1059, %v1054, %v1060
        %vm1062 = vcmp.eq.s32.totalorder %v1057, 2
        %v1063 = vxor.u32 %v1054, 2147483648
        %v1064 = vsel %vm1062, %v1063, %v1055
        %v1065 = vsel %vm1058, %v1061, %v1064
        %v1066 = vsel %vm1056, nan, %v1065
        %v1069 = vrot.slane %v963, 3
        %v1070 = vrot.slane %v1066, 3
        %1073 = vst [vmem:[%s155 + $0x20] sm:$0xe0] %v1069
        %1074 = vst [vmem:[%s155 + $0x28] sm:$0xe0] %v1070
        %v1075 = vand.u32 2147483647, %v415
        %vm1076 = vcmp.le.f32.partialorder %v1075, 0.7853982
        %vm1077 = vcmp.lt.s32.totalorder %v415, 0
        %v1078 = vand.u32 %v415, 2139095040
        %v1079 = vshrl.u32 %v1078, 23
        %v1080 = vsub.s32 %v1079, 127
        %v1081 = vand.u32 2147483647, %v415
        %v1082 = vand.u32 %v1081, 8388607
        %v1083 = vor.u32 %v1082, 8388608
        %v1084 = vsub.s32 0, %v1083
        %v1085 = vadd.s32 %v1080, 1
        %vm1086 = vcmp.gt.s32.totalorder %v1085, 0
        %v1087 = vsel %vm1086, %v1085, 0
        %v1088 = vshrl.u32 %v1087, 5
        %v1089 = vand.u32 %v1087, 31
        %v1090 = vsub.s32 32, %v1089
        %v1091 = vshrl.u32 683565275, %v1090
        %v1092 = vshll.u32 683565275, %v1089
        %v1093 = vshrl.u32 2475754826, %v1090
        %v1094 = vor.u32 %v1092, %v1093
        %v1095 = vshll.u32 2475754826, %v1089
        %v1096 = vshrl.u32 2131351028, %v1090
        %v1097 = vor.u32 %v1095, %v1096
        %v1098 = vshll.u32 2131351028, %v1089
        %v1099 = vshrl.u32 2102212464, %v1090
        %v1100 = vor.u32 %v1098, %v1099
        %v1101 = vshll.u32 2102212464, %v1089
        %v1102 = vshrl.u32 920167782, %v1090
        %v1103 = vor.u32 %v1101, %v1102
        %v1104 = vshll.u32 920167782, %v1089
        %v1105 = vshrl.u32 1326507024, %v1090
        %v1106 = vor.u32 %v1104, %v1105
        %vm1107 = vcmp.lt.s32.totalorder %v1088, 1
        %vm1108 = vcmp.lt.s32.totalorder %v1088, 2
        %vm1109 = vcmp.lt.s32.totalorder %v1088, 3
        %vm1110 = vcmp.lt.s32.totalorder %v1088, 4
        %v1111 = vsel %vm1107, %v1091, %v1094
        %v1112 = vsel %vm1110, %v1100, 2102212464
        %v1113 = vsel %vm1109, %v1097, %v1112
        %v1114 = vsel %vm1108, %v1111, %v1113
        %v1115 = vsel %vm1107, %v1094, %v1097
        %v1116 = vsel %vm1110, %v1103, 920167782
        %v1117 = vsel %vm1109, %v1100, %v1116
        %v1118 = vsel %vm1108, %v1115, %v1117
        %v1119 = vsel %vm1107, %v1097, %v1100
        %v1120 = vsel %vm1110, %v1106, 1326507024
        %v1121 = vsel %vm1109, %v1103, %v1120
        %v1122 = vsel %vm1108, %v1119, %v1121
        %v1123 = vshll.u32 %v1083, 8
        %v1124 = vmul.u32.u64.compose %v1123, %v1122
        %v1125 = vextract.low.u32 %v1124
        %v1126 = vextract.high.u32 %v1124
        %v1127 = vmul.u32.u64.compose %v1123, %v1118
        %v1128 = vextract.low.u32 %v1127
        %v1129 = vextract.high.u32 %v1127
        %v1130 = vmul.u32 %v1123, %v1114
        %v1131 = vadd.s32 %v1126, %v1128
        %vm1132 = vc.u32 %v1126, %v1128
        %v1133 = vadd.s32 %v1129, 1
        %v1134 = vsel %vm1132, %v1133, %v1129
        %v1135 = vadd.s32 %v1130, %v1134
        %v1136 = vadd.s32 %v1135, 536870912
        %v1137 = vshrl.u32 %v1136, 30
        %v1138 = vshll.u32 %v1137, 30
        %v1139 = vsub.s32 %v1135, %v1138
        %vm1140 = vcmp.lt.s32.totalorder %v1139, 0
        %v1141 = vsub.s32 0, %v1139
        %v1142 = vsel %vm1140, %v1141, %v1139
        %v1143 = vclz %v1142
        %v1144 = vsub.s32 %v1143, 2
        %vm1145 = vcmp.gt.s32.totalorder 0, %v1144
        %v1146 = vsel %vm1145, 0, %v1144
        %v1147 = vsub.s32 32, %v1146
        %v1148 = vshll.u32 %v1139, %v1146
        %v1149 = vshrl.u32 %v1131, %v1147
        %v1150 = vor.u32 %v1148, %v1149
        %v1151 = vsub.s32 4294967266, %v1146
        %v1152 = vadd.s32 %v1151, 127
        %v1153 = vshll.u32 %v1152, 23
        %v1154 = vor.u32 4788187, %v1153
        %v1155 = vand.u32 2147483647, %v1154
        %v1157 = vcvt.s32.f32 %v1150
        %v1158 = vmul.f32 %v1157, %v1155
        %v1159 = vxor.u32 %v1158, 2147483648
        %v1160 = vsel %vm1077, %v1159, %v1158
        %v1161 = vsub.s32 4, %v1137
        %v1162 = vsel %vm1077, %v1161, %v1137
        %v1163 = vsel %vm1076, %v415, %v1160
        %v1164 = vsel %vm1076, 0, %v1162
        %v1165 = vcosq.f32.pop %v1163
        %v1166 = vsinq.f32.pop %v1163
        %vm1167 = vweird.f32 %v415
        %v1168 = vand.u32 %v1164, 3
        %vm1169 = vcmp.lt.s32.totalorder %v1168, 2
        %vm1170 = vcmp.eq.s32.totalorder %v1168, 0
        %v1171 = vxor.u32 %v1166, 2147483648
        %v1172 = vsel %vm1170, %v1165, %v1171
        %vm1173 = vcmp.eq.s32.totalorder %v1168, 2
        %v1174 = vxor.u32 %v1165, 2147483648
        %v1175 = vsel %vm1173, %v1174, %v1166
        %v1176 = vsel %vm1169, %v1172, %v1175
        %v1177 = vsel %vm1167, nan, %v1176
        %v1178 = vand.u32 2147483647, %v416
        %vm1179 = vcmp.le.f32.partialorder %v1178, 0.7853982
        %vm1180 = vcmp.lt.s32.totalorder %v416, 0
        %v1181 = vand.u32 %v416, 2139095040
        %v1182 = vshrl.u32 %v1181, 23
        %v1183 = vsub.s32 %v1182, 127
        %v1184 = vand.u32 2147483647, %v416
        %v1185 = vand.u32 %v1184, 8388607
        %v1186 = vor.u32 %v1185, 8388608
        %v1187 = vsub.s32 0, %v1186
        %v1188 = vadd.s32 %v1183, 1
        %vm1189 = vcmp.gt.s32.totalorder %v1188, 0
        %v1190 = vsel %vm1189, %v1188, 0
        %v1191 = vshrl.u32 %v1190, 5
        %v1192 = vand.u32 %v1190, 31
        %v1193 = vsub.s32 32, %v1192
        %v1194 = vshrl.u32 683565275, %v1193
        %v1195 = vshll.u32 683565275, %v1192
        %v1196 = vshrl.u32 2475754826, %v1193
        %v1197 = vor.u32 %v1195, %v1196
        %v1198 = vshll.u32 2475754826, %v1192
        %v1199 = vshrl.u32 2131351028, %v1193
        %v1200 = vor.u32 %v1198, %v1199
        %v1201 = vshll.u32 2131351028, %v1192
        %v1202 = vshrl.u32 2102212464, %v1193
        %v1203 = vor.u32 %v1201, %v1202
        %v1204 = vshll.u32 2102212464, %v1192
        %v1205 = vshrl.u32 920167782, %v1193
        %v1206 = vor.u32 %v1204, %v1205
        %v1207 = vshll.u32 920167782, %v1192
        %v1208 = vshrl.u32 1326507024, %v1193
        %v1209 = vor.u32 %v1207, %v1208
        %vm1210 = vcmp.lt.s32.totalorder %v1191, 1
        %vm1211 = vcmp.lt.s32.totalorder %v1191, 2
        %vm1212 = vcmp.lt.s32.totalorder %v1191, 3
        %vm1213 = vcmp.lt.s32.totalorder %v1191, 4
        %v1214 = vsel %vm1210, %v1194, %v1197
        %v1215 = vsel %vm1213, %v1203, 2102212464
        %v1216 = vsel %vm1212, %v1200, %v1215
        %v1217 = vsel %vm1211, %v1214, %v1216
        %v1218 = vsel %vm1210, %v1197, %v1200
        %v1219 = vsel %vm1213, %v1206, 920167782
        %v1220 = vsel %vm1212, %v1203, %v1219
        %v1221 = vsel %vm1211, %v1218, %v1220
        %v1222 = vsel %vm1210, %v1200, %v1203
        %v1223 = vsel %vm1213, %v1209, 1326507024
        %v1224 = vsel %vm1212, %v1206, %v1223
        %v1225 = vsel %vm1211, %v1222, %v1224
        %v1226 = vshll.u32 %v1186, 8
        %v1227 = vmul.u32.u64.compose %v1226, %v1225
        %v1228 = vextract.low.u32 %v1227
        %v1229 = vextract.high.u32 %v1227
        %v1230 = vmul.u32.u64.compose %v1226, %v1221
        %v1231 = vextract.low.u32 %v1230
        %v1232 = vextract.high.u32 %v1230
        %v1233 = vmul.u32 %v1226, %v1217
        %v1234 = vadd.s32 %v1229, %v1231
        %vm1235 = vc.u32 %v1229, %v1231
        %v1236 = vadd.s32 %v1232, 1
        %v1237 = vsel %vm1235, %v1236, %v1232
        %v1238 = vadd.s32 %v1233, %v1237
        %v1239 = vadd.s32 %v1238, 536870912
        %v1240 = vshrl.u32 %v1239, 30
        %v1241 = vshll.u32 %v1240, 30
        %v1242 = vsub.s32 %v1238, %v1241
        %vm1243 = vcmp.lt.s32.totalorder %v1242, 0
        %v1244 = vsub.s32 0, %v1242
        %v1245 = vsel %vm1243, %v1244, %v1242
        %v1246 = vclz %v1245
        %v1247 = vsub.s32 %v1246, 2
        %vm1248 = vcmp.gt.s32.totalorder 0, %v1247
        %v1249 = vsel %vm1248, 0, %v1247
        %v1250 = vsub.s32 32, %v1249
        %v1251 = vshll.u32 %v1242, %v1249
        %v1252 = vshrl.u32 %v1234, %v1250
        %v1253 = vor.u32 %v1251, %v1252
        %v1254 = vsub.s32 4294967266, %v1249
        %v1255 = vadd.s32 %v1254, 127
        %v1256 = vshll.u32 %v1255, 23
        %v1257 = vor.u32 4788187, %v1256
        %v1258 = vand.u32 2147483647, %v1257
        %v1260 = vcvt.s32.f32 %v1253
        %v1261 = vmul.f32 %v1260, %v1258
        %v1262 = vxor.u32 %v1261, 2147483648
        %v1263 = vsel %vm1180, %v1262, %v1261
        %v1264 = vsub.s32 4, %v1240
        %v1265 = vsel %vm1180, %v1264, %v1240
        %v1266 = vsel %vm1179, %v416, %v1263
        %v1267 = vsel %vm1179, 0, %v1265
        %v1268 = vcosq.f32.pop %v1266
        %v1269 = vsinq.f32.pop %v1266
        %vm1270 = vweird.f32 %v416
        %v1271 = vand.u32 %v1267, 3
        %vm1272 = vcmp.lt.s32.totalorder %v1271, 2
        %vm1273 = vcmp.eq.s32.totalorder %v1271, 0
        %v1274 = vxor.u32 %v1269, 2147483648
        %v1275 = vsel %vm1273, %v1268, %v1274
        %vm1276 = vcmp.eq.s32.totalorder %v1271, 2
        %v1277 = vxor.u32 %v1268, 2147483648
        %v1278 = vsel %vm1276, %v1277, %v1269
        %v1279 = vsel %vm1272, %v1275, %v1278
        %v1280 = vsel %vm1270, nan, %v1279
        %vm1283 = vcmask 1044480
        %v1284 = vrot.slane %v1177, 3
        %v1285 = vsel %vm1283, %v1069, %v1284
        %v1286 = vrot.slane %v1280, 3
        %v1287 = vsel %vm1283, %v1070, %v1286
        %1290 = vst [vmem:[%s155 + $0x30] sm:$0xff] %v1285
        %1291 = vst [vmem:[%s155 + $0x38] sm:$0xff] %v1287
        %v1292 = vand.u32 2147483647, %v641
        %vm1293 = vcmp.le.f32.partialorder %v1292, 0.7853982
        %vm1294 = vcmp.lt.s32.totalorder %v641, 0
        %v1295 = vand.u32 %v641, 2139095040
        %v1296 = vshrl.u32 %v1295, 23
        %v1297 = vsub.s32 %v1296, 127
        %v1298 = vand.u32 2147483647, %v641
        %v1299 = vand.u32 %v1298, 8388607
        %v1300 = vor.u32 %v1299, 8388608
        %v1301 = vsub.s32 0, %v1300
        %v1302 = vadd.s32 %v1297, 1
        %vm1303 = vcmp.gt.s32.totalorder %v1302, 0
        %v1304 = vsel %vm1303, %v1302, 0
        %v1305 = vshrl.u32 %v1304, 5
        %v1306 = vand.u32 %v1304, 31
        %v1307 = vsub.s32 32, %v1306
        %v1308 = vshrl.u32 683565275, %v1307
        %v1309 = vshll.u32 683565275, %v1306
        %v1310 = vshrl.u32 2475754826, %v1307
        %v1311 = vor.u32 %v1309, %v1310
        %v1312 = vshll.u32 2475754826, %v1306
        %v1313 = vshrl.u32 2131351028, %v1307
        %v1314 = vor.u32 %v1312, %v1313
        %v1315 = vshll.u32 2131351028, %v1306
        %v1316 = vshrl.u32 2102212464, %v1307
        %v1317 = vor.u32 %v1315, %v1316
        %v1318 = vshll.u32 2102212464, %v1306
        %v1319 = vshrl.u32 920167782, %v1307
        %v1320 = vor.u32 %v1318, %v1319
        %v1321 = vshll.u32 920167782, %v1306
        %v1322 = vshrl.u32 1326507024, %v1307
        %v1323 = vor.u32 %v1321, %v1322
        %vm1324 = vcmp.lt.s32.totalorder %v1305, 1
        %vm1325 = vcmp.lt.s32.totalorder %v1305, 2
        %vm1326 = vcmp.lt.s32.totalorder %v1305, 3
        %vm1327 = vcmp.lt.s32.totalorder %v1305, 4
        %v1328 = vsel %vm1324, %v1308, %v1311
        %v1329 = vsel %vm1327, %v1317, 2102212464
        %v1330 = vsel %vm1326, %v1314, %v1329
        %v1331 = vsel %vm1325, %v1328, %v1330
        %v1332 = vsel %vm1324, %v1311, %v1314
        %v1333 = vsel %vm1327, %v1320, 920167782
        %v1334 = vsel %vm1326, %v1317, %v1333
        %v1335 = vsel %vm1325, %v1332, %v1334
        %v1336 = vsel %vm1324, %v1314, %v1317
        %v1337 = vsel %vm1327, %v1323, 1326507024
        %v1338 = vsel %vm1326, %v1320, %v1337
        %v1339 = vsel %vm1325, %v1336, %v1338
        %v1340 = vshll.u32 %v1300, 8
        %v1341 = vmul.u32.u64.compose %v1340, %v1339
        %v1342 = vextract.low.u32 %v1341
        %v1343 = vextract.high.u32 %v1341
        %v1344 = vmul.u32.u64.compose %v1340, %v1335
        %v1345 = vextract.low.u32 %v1344
        %v1346 = vextract.high.u32 %v1344
        %v1347 = vmul.u32 %v1340, %v1331
        %v1348 = vadd.s32 %v1343, %v1345
        %vm1349 = vc.u32 %v1343, %v1345
        %v1350 = vadd.s32 %v1346, 1
        %v1351 = vsel %vm1349, %v1350, %v1346
        %v1352 = vadd.s32 %v1347, %v1351
        %v1353 = vadd.s32 %v1352, 536870912
        %v1354 = vshrl.u32 %v1353, 30
        %v1355 = vshll.u32 %v1354, 30
        %v1356 = vsub.s32 %v1352, %v1355
        %vm1357 = vcmp.lt.s32.totalorder %v1356, 0
        %v1358 = vsub.s32 0, %v1356
        %v1359 = vsel %vm1357, %v1358, %v1356
        %v1360 = vclz %v1359
        %v1361 = vsub.s32 %v1360, 2
        %vm1362 = vcmp.gt.s32.totalorder 0, %v1361
        %v1363 = vsel %vm1362, 0, %v1361
        %v1364 = vsub.s32 32, %v1363
        %v1365 = vshll.u32 %v1356, %v1363
        %v1366 = vshrl.u32 %v1348, %v1364
        %v1367 = vor.u32 %v1365, %v1366
        %v1368 = vsub.s32 4294967266, %v1363
        %v1369 = vadd.s32 %v1368, 127
        %v1370 = vshll.u32 %v1369, 23
        %v1371 = vor.u32 4788187, %v1370
        %v1372 = vand.u32 2147483647, %v1371
        %v1374 = vcvt.s32.f32 %v1367
        %v1375 = vmul.f32 %v1374, %v1372
        %v1376 = vxor.u32 %v1375, 2147483648
        %v1377 = vsel %vm1294, %v1376, %v1375
        %v1378 = vsub.s32 4, %v1354
        %v1379 = vsel %vm1294, %v1378, %v1354
        %v1380 = vsel %vm1293, %v641, %v1377
        %v1381 = vsel %vm1293, 0, %v1379
        %v1382 = vcosq.f32.pop %v1380
        %v1383 = vsinq.f32.pop %v1380
        %vm1384 = vweird.f32 %v641
        %v1385 = vand.u32 %v1381, 3
        %vm1386 = vcmp.lt.s32.totalorder %v1385, 2
        %vm1387 = vcmp.eq.s32.totalorder %v1385, 0
        %v1388 = vxor.u32 %v1383, 2147483648
        %v1389 = vsel %vm1387, %v1382, %v1388
        %vm1390 = vcmp.eq.s32.totalorder %v1385, 2
        %v1391 = vxor.u32 %v1382, 2147483648
        %v1392 = vsel %vm1390, %v1391, %v1383
        %v1393 = vsel %vm1386, %v1389, %v1392
        %v1394 = vsel %vm1384, nan, %v1393
        %v1395 = vand.u32 2147483647, %v642
        %vm1396 = vcmp.le.f32.partialorder %v1395, 0.7853982
        %vm1397 = vcmp.lt.s32.totalorder %v642, 0
        %v1398 = vand.u32 %v642, 2139095040
        %v1399 = vshrl.u32 %v1398, 23
        %v1400 = vsub.s32 %v1399, 127
        %v1401 = vand.u32 2147483647, %v642
        %v1402 = vand.u32 %v1401, 8388607
        %v1403 = vor.u32 %v1402, 8388608
        %v1404 = vsub.s32 0, %v1403
        %v1405 = vadd.s32 %v1400, 1
        %vm1406 = vcmp.gt.s32.totalorder %v1405, 0
        %v1407 = vsel %vm1406, %v1405, 0
        %v1408 = vshrl.u32 %v1407, 5
        %v1409 = vand.u32 %v1407, 31
        %v1410 = vsub.s32 32, %v1409
        %v1411 = vshrl.u32 683565275, %v1410
        %v1412 = vshll.u32 683565275, %v1409
        %v1413 = vshrl.u32 2475754826, %v1410
        %v1414 = vor.u32 %v1412, %v1413
        %v1415 = vshll.u32 2475754826, %v1409
        %v1416 = vshrl.u32 2131351028, %v1410
        %v1417 = vor.u32 %v1415, %v1416
        %v1418 = vshll.u32 2131351028, %v1409
        %v1419 = vshrl.u32 2102212464, %v1410
        %v1420 = vor.u32 %v1418, %v1419
        %v1421 = vshll.u32 2102212464, %v1409
        %v1422 = vshrl.u32 920167782, %v1410
        %v1423 = vor.u32 %v1421, %v1422
        %v1424 = vshll.u32 920167782, %v1409
        %v1425 = vshrl.u32 1326507024, %v1410
        %v1426 = vor.u32 %v1424, %v1425
        %vm1427 = vcmp.lt.s32.totalorder %v1408, 1
        %vm1428 = vcmp.lt.s32.totalorder %v1408, 2
        %vm1429 = vcmp.lt.s32.totalorder %v1408, 3
        %vm1430 = vcmp.lt.s32.totalorder %v1408, 4
        %v1431 = vsel %vm1427, %v1411, %v1414
        %v1432 = vsel %vm1430, %v1420, 2102212464
        %v1433 = vsel %vm1429, %v1417, %v1432
        %v1434 = vsel %vm1428, %v1431, %v1433
        %v1435 = vsel %vm1427, %v1414, %v1417
        %v1436 = vsel %vm1430, %v1423, 920167782
        %v1437 = vsel %vm1429, %v1420, %v1436
        %v1438 = vsel %vm1428, %v1435, %v1437
        %v1439 = vsel %vm1427, %v1417, %v1420
        %v1440 = vsel %vm1430, %v1426, 1326507024
        %v1441 = vsel %vm1429, %v1423, %v1440
        %v1442 = vsel %vm1428, %v1439, %v1441
        %v1443 = vshll.u32 %v1403, 8
        %v1444 = vmul.u32.u64.compose %v1443, %v1442
        %v1445 = vextract.low.u32 %v1444
        %v1446 = vextract.high.u32 %v1444
        %v1447 = vmul.u32.u64.compose %v1443, %v1438
        %v1448 = vextract.low.u32 %v1447
        %v1449 = vextract.high.u32 %v1447
        %v1450 = vmul.u32 %v1443, %v1434
        %v1451 = vadd.s32 %v1446, %v1448
        %vm1452 = vc.u32 %v1446, %v1448
        %v1453 = vadd.s32 %v1449, 1
        %v1454 = vsel %vm1452, %v1453, %v1449
        %v1455 = vadd.s32 %v1450, %v1454
        %v1456 = vadd.s32 %v1455, 536870912
        %v1457 = vshrl.u32 %v1456, 30
        %v1458 = vshll.u32 %v1457, 30
        %v1459 = vsub.s32 %v1455, %v1458
        %vm1460 = vcmp.lt.s32.totalorder %v1459, 0
        %v1461 = vsub.s32 0, %v1459
        %v1462 = vsel %vm1460, %v1461, %v1459
        %v1463 = vclz %v1462
        %v1464 = vsub.s32 %v1463, 2
        %vm1465 = vcmp.gt.s32.totalorder 0, %v1464
        %v1466 = vsel %vm1465, 0, %v1464
        %v1467 = vsub.s32 32, %v1466
        %v1468 = vshll.u32 %v1459, %v1466
        %v1469 = vshrl.u32 %v1451, %v1467
        %v1470 = vor.u32 %v1468, %v1469
        %v1471 = vsub.s32 4294967266, %v1466
        %v1472 = vadd.s32 %v1471, 127
        %v1473 = vshll.u32 %v1472, 23
        %v1474 = vor.u32 4788187, %v1473
        %v1475 = vand.u32 2147483647, %v1474
        %v1477 = vcvt.s32.f32 %v1470
        %v1478 = vmul.f32 %v1477, %v1475
        %v1479 = vxor.u32 %v1478, 2147483648
        %v1480 = vsel %vm1397, %v1479, %v1478
        %v1481 = vsub.s32 4, %v1457
        %v1482 = vsel %vm1397, %v1481, %v1457
        %v1483 = vsel %vm1396, %v642, %v1480
        %v1484 = vsel %vm1396, 0, %v1482
        %v1485 = vcosq.f32.pop %v1483
        %v1486 = vsinq.f32.pop %v1483
        %vm1487 = vweird.f32 %v642
        %v1488 = vand.u32 %v1484, 3
        %vm1489 = vcmp.lt.s32.totalorder %v1488, 2
        %vm1490 = vcmp.eq.s32.totalorder %v1488, 0
        %v1491 = vxor.u32 %v1486, 2147483648
        %v1492 = vsel %vm1490, %v1485, %v1491
        %vm1493 = vcmp.eq.s32.totalorder %v1488, 2
        %v1494 = vxor.u32 %v1485, 2147483648
        %v1495 = vsel %vm1493, %v1494, %v1486
        %v1496 = vsel %vm1489, %v1492, %v1495
        %v1497 = vsel %vm1487, nan, %v1496
        %v1500 = vrot.slane %v1394, 3
        %v1501 = vsel %vm1283, %v1284, %v1500
        %v1502 = vrot.slane %v1497, 3
        %v1503 = vsel %vm1283, %v1286, %v1502
        %1506 = vst [vmem:[%s155 + $0x40] sm:$0xff] %v1501
        %1507 = vst [vmem:[%s155 + $0x48] sm:$0xff] %v1503
        %v1508 = vlaneseq
        %v1509 = vshrl.u32 %v1508, 7
        %v1510 = vsub.s32 3, %v1509
        %v1511 = vrot.slane %v639, %v1510
        %v1513 = vmul.f32 %v166, %v1511
        %v1514 = vand.u32 2147483647, %v1513
        %vm1515 = vcmp.le.f32.partialorder %v1514, 0.7853982
        %vm1516 = vcmp.lt.s32.totalorder %v1513, 0
        %v1517 = vand.u32 %v1513, 2139095040
        %v1518 = vshrl.u32 %v1517, 23
        %v1519 = vsub.s32 %v1518, 127
        %v1520 = vand.u32 2147483647, %v1513
        %v1521 = vand.u32 %v1520, 8388607
        %v1522 = vor.u32 %v1521, 8388608
        %v1523 = vsub.s32 0, %v1522
        %v1524 = vadd.s32 %v1519, 1
        %vm1525 = vcmp.gt.s32.totalorder %v1524, 0
        %v1526 = vsel %vm1525, %v1524, 0
        %v1527 = vshrl.u32 %v1526, 5
        %v1528 = vand.u32 %v1526, 31
        %v1529 = vsub.s32 32, %v1528
        %v1530 = vshrl.u32 683565275, %v1529
        %v1531 = vshll.u32 683565275, %v1528
        %v1532 = vshrl.u32 2475754826, %v1529
        %v1533 = vor.u32 %v1531, %v1532
        %v1534 = vshll.u32 2475754826, %v1528
        %v1535 = vshrl.u32 2131351028, %v1529
        %v1536 = vor.u32 %v1534, %v1535
        %v1537 = vshll.u32 2131351028, %v1528
        %v1538 = vshrl.u32 2102212464, %v1529
        %v1539 = vor.u32 %v1537, %v1538
        %v1540 = vshll.u32 2102212464, %v1528
        %v1541 = vshrl.u32 920167782, %v1529
        %v1542 = vor.u32 %v1540, %v1541
        %v1543 = vshll.u32 920167782, %v1528
        %v1544 = vshrl.u32 1326507024, %v1529
        %v1545 = vor.u32 %v1543, %v1544
        %vm1546 = vcmp.lt.s32.totalorder %v1527, 1
        %vm1547 = vcmp.lt.s32.totalorder %v1527, 2
        %vm1548 = vcmp.lt.s32.totalorder %v1527, 3
        %vm1549 = vcmp.lt.s32.totalorder %v1527, 4
        %v1550 = vsel %vm1546, %v1530, %v1533
        %v1551 = vsel %vm1549, %v1539, 2102212464
        %v1552 = vsel %vm1548, %v1536, %v1551
        %v1553 = vsel %vm1547, %v1550, %v1552
        %v1554 = vsel %vm1546, %v1533, %v1536
        %v1555 = vsel %vm1549, %v1542, 920167782
        %v1556 = vsel %vm1548, %v1539, %v1555
        %v1557 = vsel %vm1547, %v1554, %v1556
        %v1558 = vsel %vm1546, %v1536, %v1539
        %v1559 = vsel %vm1549, %v1545, 1326507024
        %v1560 = vsel %vm1548, %v1542, %v1559
        %v1561 = vsel %vm1547, %v1558, %v1560
        %v1562 = vshll.u32 %v1522, 8
        %v1563 = vmul.u32.u64.compose %v1562, %v1561
        %v1564 = vextract.low.u32 %v1563
        %v1565 = vextract.high.u32 %v1563
        %v1566 = vmul.u32.u64.compose %v1562, %v1557
        %v1567 = vextract.low.u32 %v1566
        %v1568 = vextract.high.u32 %v1566
        %v1569 = vmul.u32 %v1562, %v1553
        %v1570 = vadd.s32 %v1565, %v1567
        %vm1571 = vc.u32 %v1565, %v1567
        %v1572 = vadd.s32 %v1568, 1
        %v1573 = vsel %vm1571, %v1572, %v1568
        %v1574 = vadd.s32 %v1569, %v1573
        %v1575 = vadd.s32 %v1574, 536870912
        %v1576 = vshrl.u32 %v1575, 30
        %v1577 = vshll.u32 %v1576, 30
        %v1578 = vsub.s32 %v1574, %v1577
        %vm1579 = vcmp.lt.s32.totalorder %v1578, 0
        %v1580 = vsub.s32 0, %v1578
        %v1581 = vsel %vm1579, %v1580, %v1578
        %v1582 = vclz %v1581
        %v1583 = vsub.s32 %v1582, 2
        %vm1584 = vcmp.gt.s32.totalorder 0, %v1583
        %v1585 = vsel %vm1584, 0, %v1583
        %v1586 = vsub.s32 32, %v1585
        %v1587 = vshll.u32 %v1578, %v1585
        %v1588 = vshrl.u32 %v1570, %v1586
        %v1589 = vor.u32 %v1587, %v1588
        %v1590 = vsub.s32 4294967266, %v1585
        %v1591 = vadd.s32 %v1590, 127
        %v1592 = vshll.u32 %v1591, 23
        %v1593 = vor.u32 4788187, %v1592
        %v1594 = vand.u32 2147483647, %v1593
        %v1596 = vcvt.s32.f32 %v1589
        %v1597 = vmul.f32 %v1596, %v1594
        %v1598 = vxor.u32 %v1597, 2147483648
        %v1599 = vsel %vm1516, %v1598, %v1597
        %v1600 = vsub.s32 4, %v1576
        %v1601 = vsel %vm1516, %v1600, %v1576
        %v1602 = vsel %vm1515, %v1513, %v1599
        %v1603 = vsel %vm1515, 0, %v1601
        %v1604 = vcosq.f32.pop %v1602
        %v1605 = vsinq.f32.pop %v1602
        %vm1606 = vweird.f32 %v1513
        %v1607 = vand.u32 %v1603, 3
        %vm1608 = vcmp.lt.s32.totalorder %v1607, 2
        %vm1609 = vcmp.eq.s32.totalorder %v1607, 0
        %v1610 = vxor.u32 %v1605, 2147483648
        %v1611 = vsel %vm1609, %v1604, %v1610
        %vm1612 = vcmp.eq.s32.totalorder %v1607, 2
        %v1613 = vxor.u32 %v1604, 2147483648
        %v1614 = vsel %vm1612, %v1613, %v1605
        %v1615 = vsel %vm1608, %v1611, %v1614
        %v1616 = vsel %vm1606, nan, %v1615
        %s1617 = scalar_lea.vmem %s155, 80 [#allocation2]
        %1618 = vst.msk [vmem:[%s1617] ss:$8 sm:$0x3] %vm170, %v1616
        %1619 = vst.msk [vmem:[%s1617] ss:$8 sm:$0x0] %vm170, %v1616
        %s1620 = sand.u32 %s84, 1
        %s1621 = sand.u32 %s84, 1
        %s1622 = smul.addr %s1621, 96
        %s1623 = scalar_lea.vmem [#allocation2], %s1622
        // Predicated region
        $region29: #{tpu_custom_call.1} parent=27 // pred_check
          %p1624 = pneg %p94
        $region30: #{tpu_custom_call.1} parent=27 // pred_check_branch
          %1626 = sbr.rel (%p1624) target = $region32
        $region31: #{tpu_custom_call.1} parent=27 // pred_region
          %s1627 = smul.u32 2, %s18
          %s1628 = smul.addr %s17, 48
          %s1629 = sadd.s32 %s1627, %s1628
          %s1630 = smul.addr %s1629, 8
          %s1631 = scalar_lea.vmem %s2, %s1630
          // Predicated region
          $region33: #{tpu_custom_call.1} parent=31 // pred_check
            _
          $region34: #{tpu_custom_call.1} parent=31 // pred_check_branch
            %1633 = sbr.rel (0) target = $region36
          $region35: #{tpu_custom_call.1} parent=31 // pred_region
            // Predicated region
            $region37: #{tpu_custom_call.1} parent=35 // pred_check
              _
            $region38: #{tpu_custom_call.1} parent=35 // pred_check_branch
              %1635 = sbr.rel (0) target = $region40
            $region39: #{tpu_custom_call.1} parent=35 // pred_region
              loop: start=0, step=1, limit=1
              $region41: #{tpu_custom_call.1} parent=39 // loop_pre_header
                _
              $region42: #{tpu_custom_call.1} parent=39 // loop_header
                %s1637 = sphi 0, %s1641
                %p1638 = scmp.ge.s32.totalorder %s1637, 1
                %s1642 = sphi %s1623, %s1623
                %s1643 = sphi %s1631, %s1631
              $region43: #{tpu_custom_call.1} parent=39 // loop_header_branch
                %1640 = sbr.rel (%p1638) target = $region47
              $region44: #{tpu_custom_call.1} parent=39 // loop_body
                %v1644 = vld [vmem:[%s1642] sm:$0xff]
                %1645 = vst [vmem:[%s1643] sm:$0xff] %v1644
                %v1646 = vld [vmem:[%s1642 + $0x8] sm:$0xff]
                %1647 = vst [vmem:[%s1643 + $0x8] sm:$0xff] %v1646
                %v1648 = vld [vmem:[%s1642 + $0x10] sm:$0xff]
                %1649 = vst [vmem:[%s1643 + $0x40] sm:$0xff] %v1648
                %v1650 = vld [vmem:[%s1642 + $0x18] sm:$0xff]
                %1651 = vst [vmem:[%s1643 + $0x48] sm:$0xff] %v1650
                %v1652 = vld [vmem:[%s1642 + $0x20] sm:$0xff]
                %1653 = vst [vmem:[%s1643 + $0x80] sm:$0xff] %v1652
                %v1654 = vld [vmem:[%s1642 + $0x28] sm:$0xff]
                %1655 = vst [vmem:[%s1643 + $0x88] sm:$0xff] %v1654
                %v1656 = vld [vmem:[%s1642 + $0x30] sm:$0xff]
                %1657 = vst [vmem:[%s1643 + $0xc0] sm:$0xff] %v1656
                %v1658 = vld [vmem:[%s1642 + $0x38] sm:$0xff]
                %1659 = vst [vmem:[%s1643 + $0xc8] sm:$0xff] %v1658
                %v1660 = vld [vmem:[%s1642 + $0x40] sm:$0xff]
                %1661 = vst [vmem:[%s1643 + $0x100] sm:$0xff] %v1660
                %v1662 = vld [vmem:[%s1642 + $0x48] sm:$0xff]
                %1663 = vst [vmem:[%s1643 + $0x108] sm:$0xff] %v1662
                %v1664 = vld [vmem:[%s1642 + $0x50] sm:$0xff]
                %1665 = vst [vmem:[%s1643 + $0x140] sm:$0xff] %v1664
                %v1666 = vld [vmem:[%s1642 + $0x58] sm:$0xff]
                %1667 = vst [vmem:[%s1643 + $0x148] sm:$0xff] %v1666
              $region45: #{tpu_custom_call.1} parent=39 // loop_footer
                %s1641 = sadd.s32 1, %s1637
              $region46: #{tpu_custom_call.1} parent=39 // loop_footer_branch
                %1636 = sbr.rel target = $region42
              $region47: #{tpu_custom_call.1} parent=39 // loop_exit
                _
            $region40: #{tpu_custom_call.1} parent=35 // pred_fallthru
              _
            // Predicated region
            $region48: #{tpu_custom_call.1} parent=35 // pred_check
              _
            $region49: #{tpu_custom_call.1} parent=35 // pred_check_branch
              %1669 = sbr.rel target = $region51
            $region50: #{tpu_custom_call.1} parent=35 // pred_region
              _
            $region51: #{tpu_custom_call.1} parent=35 // pred_fallthru
              _
          $region36: #{tpu_custom_call.1} parent=31 // pred_fallthru
            _
          %1670 = vnop
        $region32: #{tpu_custom_call.1} parent=27 // pred_fallthru
          _
      $region28: #{tpu_custom_call.1} parent=5 // pred_fallthru
        _
      %p1671 = scmp.le.s32.totalorder 2, %s8
      // Predicated region
      $region52: #{tpu_custom_call.1} parent=5 // pred_check
        %p1672 = pneg %p1671
      $region53: #{tpu_custom_call.1} parent=5 // pred_check_branch
        %1674 = sbr.rel (%p1672) target = $region55
      $region54: #{tpu_custom_call.1} parent=5 // pred_region
        %s1675 = ssub.s32 %s8, 2
        // Predicated region
        $region56: #{tpu_custom_call.1} parent=54 // pred_check
          %p1676 = pneg %p100
        $region57: #{tpu_custom_call.1} parent=54 // pred_check_branch
          %1678 = sbr.rel (%p1676) target = $region59
        $region58: #{tpu_custom_call.1} parent=54 // pred_region
          %s1679 = sand.u32 %s85, 1
          %s1680 = sand.u32 %s85, 1
          %s1681 = smul.addr %s1680, 96
          %s1682 = scalar_lea.vmem [#allocation2], %s1681
        $region59: #{tpu_custom_call.1} parent=54 // pred_fallthru
          _
      $region55: #{tpu_custom_call.1} parent=5 // pred_fallthru
        _
    $region6: #{tpu_custom_call.1} parent=1 // loop_footer
      %s12 = sadd.s32 1, %s8
    $region7: #{tpu_custom_call.1} parent=1 // loop_footer_branch
      %7 = sbr.rel target = $region3
    $region8: #{tpu_custom_call.1} parent=1 // loop_exit
      _

</llo_original>
